<compile_context>
chip_gen: v6e
topology: v6e:2x2x1
jax: 0.10.0
libtpu: 0.0.40
codegen_flags: <defaults>
</compile_context>

<pallas_src>
import jax
import jax.numpy as jnp
from jax import lax
from jax.experimental import pallas as pl
from jax.experimental.pallas import tpu as pltpu

# ----------------------- synthetic config (small shapes) -----------------------
EMBED_DIM  = 32          # config.embed_dim
NUM_FRAMES = 8           # config.num_frames
NUM_LABELS = 8           # config.num_labels
INPUT_RES  = 16          # config.input_res
SEQ_LEN    = 8           # text token length
VOCAB      = 64
BATCH      = 2
LANE       = 128         # lane-dense output / padded-label width

_NEG_INF = -1e30


def _vmem_spec():
    return pl.BlockSpec(memory_space=pltpu.MemorySpace.VMEM)


def _layernorm(x, g, b, eps=1e-5):
    mu = jnp.mean(x, axis=-1, keepdims=True)
    var = jnp.mean((x - mu) ** 2, axis=-1, keepdims=True)
    return (x - mu) * lax.rsqrt(var + eps) * g + b


def _bf16(x):
    return x.astype(jnp.bfloat16)


def _mm(a_bf, b_bf):
    # MXU matmul: bf16 operands (caller hoists casts), f32 accumulation.
    return jnp.dot(a_bf, b_bf, preferred_element_type=jnp.float32)


def _mm_nt(a_bf, b_bf):
    # a @ b.T without an explicit transpose (contract last dim of both operands).
    return lax.dot_general(a_bf, b_bf, (((1,), (1,)), ((), ())),
                           preferred_element_type=jnp.float32)


# ===================== fused forward core (runs inside the kernel) ==============
def _forward_core(s, f_flat,
                  vecs_ref, qop_ref, kvw_ref, clsw_ref, clsb_ref, c2w_ref, c2b_ref):
    """video_transformer pooling + folded proj/classifier. Returns (v_feat, padded logits)."""
    B, D = s.shape
    BF = f_flat.shape[0]
    F = BF // B

    # packed [9, D] vector slab: LN gains/biases + attention biases.
    ln1_g = vecs_ref[0:1, :]; ln1_b = vecs_ref[1:2, :]
    ln3_g = vecs_ref[2:3, :]; ln3_b = vecs_ref[3:4, :]
    q_b   = vecs_ref[4:5, :]; k_b   = vecs_ref[5:6, :]
    v_b   = vecs_ref[6:7, :]; o_b   = vecs_ref[7:8, :]
    lp_b  = vecs_ref[8:9, :]

    # hoisted bf16 casts (each operand converted once)
    s_bf = _bf16(s)

    # ---- cross-attention pooling (X-Pool style, single head) ----
    t  = _layernorm(s, ln1_g, ln1_b)            # [B,  D]
    fv = _layernorm(f_flat, ln1_g, ln1_b)       # [BF, D]
    t_bf, fv_bf = _bf16(t), _bf16(fv)

    q  = _mm(t_bf, qop_ref[0]) + q_b            # [B,  D]
    kv = _mm(fv_bf, kvw_ref[...])               # [BF, 2D]  fused K|V projection
    k  = kv[:, :D] + k_b                        # [BF, D]
    v  = kv[:, D:] + v_b                        # [BF, D]
    v_bf = _bf16(v)

    # Block-diagonal masked scores: row b only attends to its own F frames.
    # Keeps every contraction a 2-D MXU matmul; no [B,F,D] reshape in-kernel.
    scores = _mm_nt(_bf16(q), _bf16(k)) * (1.0 / (D ** 0.5))       # [B, BF]
    row = lax.broadcasted_iota(jnp.int32, (B, BF), 0)
    col = lax.broadcasted_iota(jnp.int32, (B, BF), 1)
    mask = (col >= row * F) & (col < (row + 1) * F)
    scores = jnp.where(mask, scores, _NEG_INF)
    scores = scores - jnp.max(scores, axis=-1, keepdims=True)
    p = jnp.exp(scores)
    attn = p * pl.reciprocal(jnp.sum(p, axis=-1, keepdims=True), approx=True)
    ctx = _mm(_bf16(attn), v_bf)                                   # [B, D]  (MXU)

    attn_out = _mm(_bf16(ctx), qop_ref[1]) + o_b
    ao_bf = _bf16(attn_out)
    lin = _mm(ao_bf, qop_ref[2]) + lp_b
    v_feat = _layernorm(attn_out + lin, ln3_g, ln3_b)              # [B, D]
    vf_bf = _bf16(v_feat)

    # ---- classifier with t_proj / v_proj algebraically folded in ----
    # TODO(synk): nn.Dropout(0.1) applied as identity (eval semantics); the folding
    # below is only valid while dropout stays identity.
    h = _mm(s_bf, clsw_ref[0]) + _mm(vf_bf, clsw_ref[1]) + clsb_ref[...]   # [B, 16D]
    h = jnp.maximum(h, 0.0)
    # c2 padded to LANE columns: zero weights / -1e30 bias on padding -> unmasked
    # MXU pop and unmasked lane-dense store.
    logits_pad = _mm(_bf16(h), c2w_ref[...]) + c2b_ref[...]                # [B, LANE]
    return v_feat, logits_pad


def _sim_matrix(s, v_feat, eps=1e-8):
    t  = s      * lax.rsqrt(jnp.sum(s * s,           axis=-1, keepdims=True) + eps)
    vn = v_feat * lax.rsqrt(jnp.sum(v_feat * v_feat, axis=-1, keepdims=True) + eps)
    return _mm_nt(_bf16(t), _bf16(vn))                                     # [B, B]


def _losses(logits_pad, y_pad):
    """CE + EDL over padded logits. Padded columns hold -1e30 (exp->0, relu->0)."""
    B = logits_pad.shape[0]
    m = jnp.max(logits_pad, axis=-1, keepdims=True)
    lse = jnp.log(jnp.sum(jnp.exp(logits_pad - m), axis=-1, keepdims=True)) + m
    nll = lse - jnp.sum(y_pad * logits_pad, axis=-1, keepdims=True)            # [B, 1]
    # TODO(synk): the EDL(config) module definition is not in the reference snippet;
    # a standard evidential type-II MLE (log) loss with ReLU evidence is used here.
    alpha = jnp.maximum(logits_pad, 0.0) + 1.0       # padded columns -> exactly 1.0
    ssum = jnp.sum(alpha, axis=-1, keepdims=True) - float(LANE - NUM_LABELS)
    edl = jnp.sum(y_pad * (jnp.log(ssum) - jnp.log(alpha)), axis=-1, keepdims=True)
    packed = jnp.concatenate([nll, edl], axis=-1)                              # [B, 2]
    return jnp.sum(packed, axis=0, keepdims=True) * (1.0 / B)                  # [1, 2]


# ============================ fused kernels =====================================
def _train_kernel(s_ref, f_ref, y_ref,
                  vecs_ref, qop_ref, kvw_ref, clsw_ref, clsb_ref, c2w_ref, c2b_ref,
                  out_ref):
    s = s_ref[...]
    v_feat, logits_pad = _forward_core(s, f_ref[...], vecs_ref, qop_ref, kvw_ref,
                                       clsw_ref, clsb_ref, c2w_ref, c2b_ref)
    B = s.shape[0]
    sim  = _sim_matrix(s, v_feat)                              # [B, B]
    loss = _losses(logits_pad, y_ref[...])                     # [1, 2]
    # Single merged lane-dense output slab: rows [0,B) sim, [B,2B) logits, row 2B loss.
    sim_row  = jnp.concatenate([sim,  jnp.zeros((B, LANE - B), jnp.float32)], axis=-1)
    loss_row = jnp.concatenate([loss, jnp.zeros((1, LANE - 2), jnp.float32)], axis=-1)
    out_ref[...] = jnp.concatenate([sim_row, logits_pad, loss_row], axis=0)


def _eval_kernel(s_ref, f_ref,
                 vecs_ref, qop_ref, kvw_ref, clsw_ref, clsb_ref, c2w_ref, c2b_ref,
                 out_ref):
    _, logits_pad = _forward_core(s_ref[...], f_ref[...], vecs_ref, qop_ref, kvw_ref,
                                  clsw_ref, clsb_ref, c2w_ref, c2b_ref)
    out_ref[...] = logits_pad                                  # [B, LANE] lane-dense


def _param_args(kp):
    return (kp['vecs'], kp['qop_w'], kp['kv_w'],
            kp['cls_w'], kp['cls_b'], kp['c2_w'], kp['c2_b'])


def fused_train_step(s_feat, f_flat, onehot_pad, kp):
    B = s_feat.shape[0]
    args = (s_feat, f_flat, onehot_pad) + _param_args(kp)
    out = pl.pallas_call(
        _train_kernel,
        out_shape=jax.ShapeDtypeStruct((2 * B + 1, LANE), jnp.float32),
        in_specs=[_vmem_spec()] * len(args),
        out_specs=_vmem_spec(),
        compiler_params=pltpu.CompilerParams(vmem_limit_bytes=32 * 1024 * 1024),
    )(*args)
    sim     = out[0:B, 0:B]
    logits  = out[B:2 * B, 0:NUM_LABELS]
    ce_loss, edl_loss = out[2 * B, 0], out[2 * B, 1]
    return sim, logits, ce_loss, edl_loss


def fused_eval_step(s_feat, f_flat, kp):
    B = s_feat.shape[0]
    args = (s_feat, f_flat) + _param_args(kp)
    out = pl.pallas_call(
        _eval_kernel,
        out_shape=jax.ShapeDtypeStruct((B, LANE), jnp.float32),
        in_specs=[_vmem_spec()] * len(args),
        out_specs=_vmem_spec(),
        compiler_params=pltpu.CompilerParams(vmem_limit_bytes=32 * 1024 * 1024),
    )(*args)
    return out[:, 0:NUM_LABELS]


# ======================= plain-JAX glue: stand-in CLIP backbones ================
def synthetic_clip_features(text_ids, video, p):
    # TODO(synk): pretrained CLIPModel (ViT-B/32) text & image encoders have no clean
    # Pallas equivalent in-script; replaced by deterministic linear stand-ins that
    # produce features of the same shapes ([B, D] text CLS, [B*F, D] frame feats).
    tok = p['tok_embed'][text_ids]                              # [B, L, D]
    w_feat = tok                                                # word-level feats (unused downstream)
    s_feat = jnp.mean(tok, axis=1) @ p['text_w']                # [B, D]
    frames = video.reshape(-1, 3 * INPUT_RES * INPUT_RES)       # [B*F, 3*R*R] (NCHW flattened)
    f_flat = frames @ p['img_w']                                # [B*F, D]  (pre-flattened for kernel)
    return w_feat, s_feat, f_flat


# ======================= full forward (mirrors CLIPStochastic.forward) ==========
def clip_stochastic_forward(data, params, packed, is_train=True):
    video = data['video']                                       # [B, F, 3, R, R]
    text_ids = data['text']                                     # [B, L]
    label = data['label']                                       # [B]

    _, s_feat, f_flat = synthetic_clip_features(text_ids, video, params)

    if is_train:
        onehot_pad = jax.nn.one_hot(label, LANE, dtype=jnp.float32)   # lane-dense one-hot
        output, _vqa_logits, ce_loss, edl_loss = fused_train_step(s_feat, f_flat,
                                                                  onehot_pad, packed)
        return output, ce_loss, edl_loss
    else:
        return fused_eval_step(s_feat, f_flat, packed)


# ======================= deterministic parameter init ===========================
def init_params(key):
    d = EMBED_DIM
    ks = jax.random.split(key, 16)

    def lin(k, fin, fout):
        return 0.02 * jax.random.normal(k, (fin, fout), jnp.float32)

    def vec(shape, val=0.0):
        return jnp.full((1,) + shape, val, jnp.float32)

    return {
        # stand-in CLIP backbones
        'tok_embed': 0.02 * jax.random.normal(ks[0], (VOCAB, d), jnp.float32),
        'text_w':    lin(ks[1], d, d),
        'img_w':     lin(ks[2], 3 * INPUT_RES * INPUT_RES, d),
        # video_transformer (cross-attention pooling)
        'ln1_g': vec((d,), 1.0), 'ln1_b': vec((d,), 0.0),
        'q_w': lin(ks[3], d, d), 'q_b': vec((d,)),
        'k_w': lin(ks[4], d, d), 'k_b': vec((d,)),
        'v_w': lin(ks[5], d, d), 'v_b': vec((d,)),
        'o_w': lin(ks[6], d, d), 'o_b': vec((d,)),
        'lp_w': lin(ks[7], d, d), 'lp_b': vec((d,)),
        'ln3_g': vec((d,), 1.0), 'ln3_b': vec((d,), 0.0),
        # t_proj / v_proj : D -> 4D
        't_proj_w': lin(ks[8], d, 4 * d), 't_proj_b': vec((4 * d,)),
        'v_proj_w': lin(ks[9], d, 4 * d), 'v_proj_b': vec((4 * d,)),
        # classifier: 8D -> 16D -> num_labels
        'c1_w': lin(ks[10], 8 * d, 16 * d), 'c1_b': vec((16 * d,)),
        'c2_w': lin(ks[11], 16 * d, NUM_LABELS), 'c2_b': vec((NUM_LABELS,)),
    }


def pack_params(p):
    """Pack parameters into a few contiguous slabs; fold t_proj/v_proj into classifier."""
    d = EMBED_DIM
    vecs = jnp.concatenate([p['ln1_g'], p['ln1_b'], p['ln3_g'], p['ln3_b'],
                            p['q_b'], p['k_b'], p['v_b'], p['o_b'], p['lp_b']],
                           axis=0)                                            # [9, D]  f32
    qop_w = jnp.stack([p['q_w'], p['o_w'], p['lp_w']],
                      axis=0).astype(jnp.bfloat16)                            # [3, D, D]
    kv_w = jnp.concatenate([p['k_w'], p['v_w']],
                           axis=1).astype(jnp.bfloat16)                       # [D, 2D]

    # Algebraic fold (valid while dropout is identity):
    #   h1 = s@t_proj_w@c1_w[:4D] + v@v_proj_w@c1_w[4D:] + (t_b@c1a + v_b@c1b + c1_b)
    c1a, c1b = p['c1_w'][:4 * d], p['c1_w'][4 * d:]
    w_s = p['t_proj_w'] @ c1a                                                 # [D, 16D]
    w_v = p['v_proj_w'] @ c1b                                                 # [D, 16D]
    b_eff = p['t_proj_b'] @ c1a + p['v_proj_b'] @ c1b + p['c1_b']             # [1, 16D]
    cls_w = jnp.stack([w_s, w_v], axis=0).astype(jnp.bfloat16)                # [2, D, 16D]

    # Final layer padded to LANE output columns (zero weights, -1e30 bias on padding).
    c2_w = jnp.zeros((16 * d, LANE), jnp.float32).at[:, :NUM_LABELS].set(p['c2_w'])
    c2_b = jnp.full((1, LANE), _NEG_INF, jnp.float32).at[:, :NUM_LABELS].set(p['c2_b'])

    return {
        'vecs': vecs, 'qop_w': qop_w, 'kv_w': kv_w,
        'cls_w': cls_w, 'cls_b': b_eff,
        'c2_w': c2_w.astype(jnp.bfloat16), 'c2_b': c2_b,
    }


# ======================= main ===================================================
if __name__ == "__main__":
    key = jax.random.PRNGKey(0)
    k_par, k_vid, k_txt, k_lab = jax.random.split(key, 4)

    params = init_params(k_par)
    packed = pack_params(params)
    data = {
        'video': jax.random.normal(
            k_vid, (BATCH, NUM_FRAMES, 3, INPUT_RES, INPUT_RES), jnp.float32),
        'text': jax.random.randint(k_txt, (BATCH, SEQ_LEN), 0, VOCAB, jnp.int32),
        'label': jax.random.randint(k_lab, (BATCH,), 0, NUM_LABELS, jnp.int32),
    }

    # training path: (sim_matrix, ce_loss, edl_loss)
    output, ce_loss, edl_loss = clip_stochastic_forward(data, params, packed, is_train=True)
    jax.block_until_ready((output, ce_loss, edl_loss))

    # eval path: vqa_logits
    vqa_logits = clip_stochastic_forward(data, params, packed, is_train=False)
    jax.block_until_ready(vqa_logits)

    assert output.shape == (BATCH, BATCH)
    assert vqa_logits.shape == (BATCH, NUM_LABELS)
    assert bool(jnp.isfinite(ce_loss)) and bool(jnp.isfinite(edl_loss))
    assert bool(jnp.all(jnp.isfinite(output))) and bool(jnp.all(jnp.isfinite(vqa_logits)))
    print("KERNEL_OK")
</pallas_src>

<mosaic_0001>
module attributes {stable_mosaic.version = 11 : i64} {
  func.func @_train_kernel(%arg0: memref<2x32xf32, #tpu.memory_space<vmem>>, %arg1: memref<16x32xf32, #tpu.memory_space<vmem>>, %arg2: memref<2x128xf32, #tpu.memory_space<vmem>>, %arg3: memref<9x32xf32, #tpu.memory_space<vmem>>, %arg4: memref<3x32x32xbf16, #tpu.memory_space<vmem>>, %arg5: memref<32x64xbf16, #tpu.memory_space<vmem>>, %arg6: memref<2x32x512xbf16, #tpu.memory_space<vmem>>, %arg7: memref<1x512xf32, #tpu.memory_space<vmem>>, %arg8: memref<512x128xbf16, #tpu.memory_space<vmem>>, %arg9: memref<1x128xf32, #tpu.memory_space<vmem>>, %arg10: memref<5x128xf32, #tpu.memory_space<vmem>>) attributes {dimension_semantics = [], scalar_prefetch = 0 : i64, scratch_operands = 0 : i64, tpu.core_type = #tpu.core_type<tc>} {
    %c0 = arith.constant 0 : index
    %c0_0 = arith.constant 0 : index
    %0 = vector.load %arg0[%c0, %c0_0] : memref<2x32xf32, #tpu.memory_space<vmem>>, vector<2x32xf32>
    %c0_1 = arith.constant 0 : index
    %c0_2 = arith.constant 0 : index
    %1 = vector.load %arg1[%c0_1, %c0_2] : memref<16x32xf32, #tpu.memory_space<vmem>>, vector<16x32xf32>
    %c0_3 = arith.constant 0 : index
    %c0_4 = arith.constant 0 : index
    %2 = vector.load %arg3[%c0_3, %c0_4] : memref<9x32xf32, #tpu.memory_space<vmem>>, vector<1x32xf32>
    %c1 = arith.constant 1 : index
    %c0_5 = arith.constant 0 : index
    %3 = vector.load %arg3[%c1, %c0_5] : memref<9x32xf32, #tpu.memory_space<vmem>>, vector<1x32xf32>
    %c2 = arith.constant 2 : index
    %c0_6 = arith.constant 0 : index
    %4 = vector.load %arg3[%c2, %c0_6] : memref<9x32xf32, #tpu.memory_space<vmem>>, vector<1x32xf32>
    %c3 = arith.constant 3 : index
    %c0_7 = arith.constant 0 : index
    %5 = vector.load %arg3[%c3, %c0_7] : memref<9x32xf32, #tpu.memory_space<vmem>>, vector<1x32xf32>
    %c4 = arith.constant 4 : index
    %c0_8 = arith.constant 0 : index
    %6 = vector.load %arg3[%c4, %c0_8] : memref<9x32xf32, #tpu.memory_space<vmem>>, vector<1x32xf32>
    %c5 = arith.constant 5 : index
    %c0_9 = arith.constant 0 : index
    %7 = vector.load %arg3[%c5, %c0_9] : memref<9x32xf32, #tpu.memory_space<vmem>>, vector<1x32xf32>
    %c6 = arith.constant 6 : index
    %c0_10 = arith.constant 0 : index
    %8 = vector.load %arg3[%c6, %c0_10] : memref<9x32xf32, #tpu.memory_space<vmem>>, vector<1x32xf32>
    %c7 = arith.constant 7 : index
    %c0_11 = arith.constant 0 : index
    %9 = vector.load %arg3[%c7, %c0_11] : memref<9x32xf32, #tpu.memory_space<vmem>>, vector<1x32xf32>
    %c8 = arith.constant 8 : index
    %c0_12 = arith.constant 0 : index
    %10 = vector.load %arg3[%c8, %c0_12] : memref<9x32xf32, #tpu.memory_space<vmem>>, vector<1x32xf32>
    %11 = arith.truncf %0 : vector<2x32xf32> to vector<2x32xbf16>
    %cst = arith.constant dense<0.000000e+00> : vector<2xf32>
    %12 = vector.multi_reduction <add>, %0, %cst [1] : vector<2x32xf32> to vector<2xf32>
    %13 = vector.shape_cast %12 : vector<2xf32> to vector<2x1xf32>
    %cst_13 = arith.constant 3.200000e+01 : f32
    %14 = vector.broadcast %cst_13 : f32 to vector<2x1xf32>
    %15 = arith.divf %13, %14 : vector<2x1xf32>
    %16 = vector.broadcast %15 : vector<2x1xf32> to vector<2x32xf32>
    %17 = arith.subf %0, %16 : vector<2x32xf32>
    %18 = arith.mulf %17, %17 : vector<2x32xf32>
    %cst_14 = arith.constant dense<0.000000e+00> : vector<2xf32>
    %19 = vector.multi_reduction <add>, %18, %cst_14 [1] : vector<2x32xf32> to vector<2xf32>
    %20 = vector.shape_cast %19 : vector<2xf32> to vector<2x1xf32>
    %cst_15 = arith.constant 3.200000e+01 : f32
    %21 = vector.broadcast %cst_15 : f32 to vector<2x1xf32>
    %22 = arith.divf %20, %21 : vector<2x1xf32>
    %23 = vector.broadcast %15 : vector<2x1xf32> to vector<2x32xf32>
    %24 = arith.subf %0, %23 : vector<2x32xf32>
    %cst_16 = arith.constant 9.99999974E-6 : f32
    %25 = vector.broadcast %cst_16 : f32 to vector<2x1xf32>
    %26 = arith.addf %22, %25 : vector<2x1xf32>
    %27 = math.rsqrt %26 : vector<2x1xf32>
    %28 = vector.broadcast %27 : vector<2x1xf32> to vector<2x32xf32>
    %29 = arith.mulf %24, %28 : vector<2x32xf32>
    %30 = vector.broadcast %2 : vector<1x32xf32> to vector<2x32xf32>
    %31 = arith.mulf %29, %30 : vector<2x32xf32>
    %32 = vector.broadcast %3 : vector<1x32xf32> to vector<2x32xf32>
    %33 = arith.addf %31, %32 : vector<2x32xf32>
    %cst_17 = arith.constant dense<0.000000e+00> : vector<16xf32>
    %34 = vector.multi_reduction <add>, %1, %cst_17 [1] : vector<16x32xf32> to vector<16xf32>
    %35 = vector.shape_cast %34 : vector<16xf32> to vector<16x1xf32>
    %cst_18 = arith.constant 3.200000e+01 : f32
    %36 = vector.broadcast %cst_18 : f32 to vector<16x1xf32>
    %37 = arith.divf %35, %36 : vector<16x1xf32>
    %38 = vector.broadcast %37 : vector<16x1xf32> to vector<16x32xf32>
    %39 = arith.subf %1, %38 : vector<16x32xf32>
    %40 = arith.mulf %39, %39 : vector<16x32xf32>
    %cst_19 = arith.constant dense<0.000000e+00> : vector<16xf32>
    %41 = vector.multi_reduction <add>, %40, %cst_19 [1] : vector<16x32xf32> to vector<16xf32>
    %42 = vector.shape_cast %41 : vector<16xf32> to vector<16x1xf32>
    %cst_20 = arith.constant 3.200000e+01 : f32
    %43 = vector.broadcast %cst_20 : f32 to vector<16x1xf32>
    %44 = arith.divf %42, %43 : vector<16x1xf32>
    %45 = vector.broadcast %37 : vector<16x1xf32> to vector<16x32xf32>
    %46 = arith.subf %1, %45 : vector<16x32xf32>
    %cst_21 = arith.constant 9.99999974E-6 : f32
    %47 = vector.broadcast %cst_21 : f32 to vector<16x1xf32>
    %48 = arith.addf %44, %47 : vector<16x1xf32>
    %49 = math.rsqrt %48 : vector<16x1xf32>
    %50 = vector.broadcast %49 : vector<16x1xf32> to vector<16x32xf32>
    %51 = arith.mulf %46, %50 : vector<16x32xf32>
    %52 = vector.broadcast %2 : vector<1x32xf32> to vector<16x32xf32>
    %53 = arith.mulf %51, %52 : vector<16x32xf32>
    %54 = vector.broadcast %3 : vector<1x32xf32> to vector<16x32xf32>
    %55 = arith.addf %53, %54 : vector<16x32xf32>
    %56 = arith.truncf %33 : vector<2x32xf32> to vector<2x32xbf16>
    %57 = arith.truncf %55 : vector<16x32xf32> to vector<16x32xbf16>
    %c0_22 = arith.constant 0 : index
    %c0_23 = arith.constant 0 : index
    %c0_24 = arith.constant 0 : index
    %58 = vector.load %arg4[%c0_22, %c0_23, %c0_24] : memref<3x32x32xbf16, #tpu.memory_space<vmem>>, vector<1x32x32xbf16>
    %59 = vector.shape_cast %58 : vector<1x32x32xbf16> to vector<32x32xbf16>
    %cst_25 = arith.constant dense<0.000000e+00> : vector<2x32xf32>
    %60 = tpu.matmul %56, %59, %cst_25 {dimension_numbers = #tpu.dot_dimension_numbers<[1], [0], [0], [1], [0, 0, 1, 1], [], []>} : vector<2x32xbf16>, vector<32x32xbf16>, vector<2x32xf32> -> vector<2x32xf32>
    %61 = vector.broadcast %6 : vector<1x32xf32> to vector<2x32xf32>
    %62 = arith.addf %60, %61 : vector<2x32xf32>
    %c0_26 = arith.constant 0 : index
    %c0_27 = arith.constant 0 : index
    %63 = vector.load %arg5[%c0_26, %c0_27] : memref<32x64xbf16, #tpu.memory_space<vmem>>, vector<32x64xbf16>
    %cst_28 = arith.constant dense<0.000000e+00> : vector<16x64xf32>
    %64 = tpu.matmul %57, %63, %cst_28 {dimension_numbers = #tpu.dot_dimension_numbers<[1], [0], [0], [1], [0, 0, 1, 1], [], []>} : vector<16x32xbf16>, vector<32x64xbf16>, vector<16x64xf32> -> vector<16x64xf32>
    %65 = vector.extract_strided_slice %64 {offsets = [0, 0], sizes = [16, 32], strides = [1, 1]} : vector<16x64xf32> to vector<16x32xf32>
    %66 = vector.broadcast %7 : vector<1x32xf32> to vector<16x32xf32>
    %67 = arith.addf %65, %66 : vector<16x32xf32>
    %68 = vector.extract_strided_slice %64 {offsets = [0, 32], sizes = [16, 32], strides = [1, 1]} : vector<16x64xf32> to vector<16x32xf32>
    %69 = vector.broadcast %8 : vector<1x32xf32> to vector<16x32xf32>
    %70 = arith.addf %68, %69 : vector<16x32xf32>
    %71 = arith.truncf %70 : vector<16x32xf32> to vector<16x32xbf16>
    %72 = arith.truncf %62 : vector<2x32xf32> to vector<2x32xbf16>
    %73 = arith.truncf %67 : vector<16x32xf32> to vector<16x32xbf16>
    %cst_29 = arith.constant dense<0.000000e+00> : vector<2x16xf32>
    %74 = tpu.matmul %72, %73, %cst_29 {dimension_numbers = #tpu.dot_dimension_numbers<[1], [1], [0], [0], [0, 0, 1, 0], [], []>} : vector<2x32xbf16>, vector<16x32xbf16>, vector<2x16xf32> -> vector<2x16xf32>
    %cst_30 = arith.constant 0.176776692 : f32
    %75 = vector.broadcast %cst_30 : f32 to vector<2x16xf32>
    %76 = arith.mulf %74, %75 : vector<2x16xf32>
    %77 = tpu.iota {dimensions = array<i32: 0>} : vector<2x16xi32>
    %78 = tpu.iota {dimensions = array<i32: 1>} : vector<2x16xi32>
    %c8_i32 = arith.constant 8 : i32
    %79 = vector.broadcast %c8_i32 : i32 to vector<2x16xi32>
    %80 = arith.muli %77, %79 : vector<2x16xi32>
    %81 = arith.cmpi sge, %78, %80 : vector<2x16xi32>
    %c1_i32 = arith.constant 1 : i32
    %82 = vector.broadcast %c1_i32 : i32 to vector<2x16xi32>
    %83 = arith.addi %77, %82 : vector<2x16xi32>
    %c8_i32_31 = arith.constant 8 : i32
    %84 = vector.broadcast %c8_i32_31 : i32 to vector<2x16xi32>
    %85 = arith.muli %83, %84 : vector<2x16xi32>
    %86 = arith.cmpi slt, %78, %85 : vector<2x16xi32>
    %87 = arith.andi %81, %86 : vector<2x16xi1>
    %cst_32 = arith.constant -1.000000e+30 : f32
    %88 = vector.broadcast %cst_32 : f32 to vector<2x16xf32>
    %89 = arith.select %87, %76, %88 : vector<2x16xi1>, vector<2x16xf32>
    %cst_33 = arith.constant dense<0xFF800000> : vector<2xf32>
    %90 = vector.multi_reduction <maximumf>, %89, %cst_33 [1] : vector<2x16xf32> to vector<2xf32>
    %91 = vector.shape_cast %90 : vector<2xf32> to vector<2x1xf32>
    %92 = vector.broadcast %91 : vector<2x1xf32> to vector<2x16xf32>
    %93 = arith.subf %89, %92 : vector<2x16xf32>
    %94 = math.exp %93 : vector<2x16xf32>
    %cst_34 = arith.constant dense<0.000000e+00> : vector<2xf32>
    %95 = vector.multi_reduction <add>, %94, %cst_34 [1] : vector<2x16xf32> to vector<2xf32>
    %96 = vector.shape_cast %95 : vector<2xf32> to vector<2x1xf32>
    %97 = tpu.reciprocal %96 {approx = true} : vector<2x1xf32> -> vector<2x1xf32>
    %98 = vector.broadcast %97 : vector<2x1xf32> to vector<2x16xf32>
    %99 = arith.mulf %94, %98 : vector<2x16xf32>
    %100 = arith.truncf %99 : vector<2x16xf32> to vector<2x16xbf16>
    %cst_35 = arith.constant dense<0.000000e+00> : vector<2x32xf32>
    %101 = tpu.matmul %100, %71, %cst_35 {dimension_numbers = #tpu.dot_dimension_numbers<[1], [0], [0], [1], [0, 0, 1, 1], [], []>} : vector<2x16xbf16>, vector<16x32xbf16>, vector<2x32xf32> -> vector<2x32xf32>
    %102 = arith.truncf %101 : vector<2x32xf32> to vector<2x32xbf16>
    %c1_36 = arith.constant 1 : index
    %c0_37 = arith.constant 0 : index
    %c0_38 = arith.constant 0 : index
    %103 = vector.load %arg4[%c1_36, %c0_37, %c0_38] : memref<3x32x32xbf16, #tpu.memory_space<vmem>>, vector<1x32x32xbf16>
    %104 = vector.shape_cast %103 : vector<1x32x32xbf16> to vector<32x32xbf16>
    %cst_39 = arith.constant dense<0.000000e+00> : vector<2x32xf32>
    %105 = tpu.matmul %102, %104, %cst_39 {dimension_numbers = #tpu.dot_dimension_numbers<[1], [0], [0], [1], [0, 0, 1, 1], [], []>} : vector<2x32xbf16>, vector<32x32xbf16>, vector<2x32xf32> -> vector<2x32xf32>
    %106 = vector.broadcast %9 : vector<1x32xf32> to vector<2x32xf32>
    %107 = arith.addf %105, %106 : vector<2x32xf32>
    %108 = arith.truncf %107 : vector<2x32xf32> to vector<2x32xbf16>
    %c2_40 = arith.constant 2 : index
    %c0_41 = arith.constant 0 : index
    %c0_42 = arith.constant 0 : index
    %109 = vector.load %arg4[%c2_40, %c0_41, %c0_42] : memref<3x32x32xbf16, #tpu.memory_space<vmem>>, vector<1x32x32xbf16>
    %110 = vector.shape_cast %109 : vector<1x32x32xbf16> to vector<32x32xbf16>
    %cst_43 = arith.constant dense<0.000000e+00> : vector<2x32xf32>
    %111 = tpu.matmul %108, %110, %cst_43 {dimension_numbers = #tpu.dot_dimension_numbers<[1], [0], [0], [1], [0, 0, 1, 1], [], []>} : vector<2x32xbf16>, vector<32x32xbf16>, vector<2x32xf32> -> vector<2x32xf32>
    %112 = vector.broadcast %10 : vector<1x32xf32> to vector<2x32xf32>
    %113 = arith.addf %111, %112 : vector<2x32xf32>
    %114 = arith.addf %107, %113 : vector<2x32xf32>
    %cst_44 = arith.constant dense<0.000000e+00> : vector<2xf32>
    %115 = vector.multi_reduction <add>, %114, %cst_44 [1] : vector<2x32xf32> to vector<2xf32>
    %116 = vector.shape_cast %115 : vector<2xf32> to vector<2x1xf32>
    %cst_45 = arith.constant 3.200000e+01 : f32
    %117 = vector.broadcast %cst_45 : f32 to vector<2x1xf32>
    %118 = arith.divf %116, %117 : vector<2x1xf32>
    %119 = vector.broadcast %118 : vector<2x1xf32> to vector<2x32xf32>
    %120 = arith.subf %114, %119 : vector<2x32xf32>
    %121 = arith.mulf %120, %120 : vector<2x32xf32>
    %cst_46 = arith.constant dense<0.000000e+00> : vector<2xf32>
    %122 = vector.multi_reduction <add>, %121, %cst_46 [1] : vector<2x32xf32> to vector<2xf32>
    %123 = vector.shape_cast %122 : vector<2xf32> to vector<2x1xf32>
    %cst_47 = arith.constant 3.200000e+01 : f32
    %124 = vector.broadcast %cst_47 : f32 to vector<2x1xf32>
    %125 = arith.divf %123, %124 : vector<2x1xf32>
    %126 = vector.broadcast %118 : vector<2x1xf32> to vector<2x32xf32>
    %127 = arith.subf %114, %126 : vector<2x32xf32>
    %cst_48 = arith.constant 9.99999974E-6 : f32
    %128 = vector.broadcast %cst_48 : f32 to vector<2x1xf32>
    %129 = arith.addf %125, %128 : vector<2x1xf32>
    %130 = math.rsqrt %129 : vector<2x1xf32>
    %131 = vector.broadcast %130 : vector<2x1xf32> to vector<2x32xf32>
    %132 = arith.mulf %127, %131 : vector<2x32xf32>
    %133 = vector.broadcast %4 : vector<1x32xf32> to vector<2x32xf32>
    %134 = arith.mulf %132, %133 : vector<2x32xf32>
    %135 = vector.broadcast %5 : vector<1x32xf32> to vector<2x32xf32>
    %136 = arith.addf %134, %135 : vector<2x32xf32>
    %137 = arith.truncf %136 : vector<2x32xf32> to vector<2x32xbf16>
    %c0_49 = arith.constant 0 : index
    %c0_50 = arith.constant 0 : index
    %c0_51 = arith.constant 0 : index
    %138 = vector.load %arg6[%c0_49, %c0_50, %c0_51] : memref<2x32x512xbf16, #tpu.memory_space<vmem>>, vector<1x32x512xbf16>
    %139 = vector.shape_cast %138 : vector<1x32x512xbf16> to vector<32x512xbf16>
    %cst_52 = arith.constant dense<0.000000e+00> : vector<2x512xf32>
    %140 = tpu.matmul %11, %139, %cst_52 {dimension_numbers = #tpu.dot_dimension_numbers<[1], [0], [0], [1], [0, 0, 1, 1], [], []>} : vector<2x32xbf16>, vector<32x512xbf16>, vector<2x512xf32> -> vector<2x512xf32>
    %c1_53 = arith.constant 1 : index
    %c0_54 = arith.constant 0 : index
    %c0_55 = arith.constant 0 : index
    %141 = vector.load %arg6[%c1_53, %c0_54, %c0_55] : memref<2x32x512xbf16, #tpu.memory_space<vmem>>, vector<1x32x512xbf16>
    %142 = vector.shape_cast %141 : vector<1x32x512xbf16> to vector<32x512xbf16>
    %cst_56 = arith.constant dense<0.000000e+00> : vector<2x512xf32>
    %143 = tpu.matmul %137, %142, %cst_56 {dimension_numbers = #tpu.dot_dimension_numbers<[1], [0], [0], [1], [0, 0, 1, 1], [], []>} : vector<2x32xbf16>, vector<32x512xbf16>, vector<2x512xf32> -> vector<2x512xf32>
    %144 = arith.addf %140, %143 : vector<2x512xf32>
    %c0_57 = arith.constant 0 : index
    %c0_58 = arith.constant 0 : index
    %145 = vector.load %arg7[%c0_57, %c0_58] : memref<1x512xf32, #tpu.memory_space<vmem>>, vector<1x512xf32>
    %146 = vector.broadcast %145 : vector<1x512xf32> to vector<2x512xf32>
    %147 = arith.addf %144, %146 : vector<2x512xf32>
    %cst_59 = arith.constant 0.000000e+00 : f32
    %148 = vector.broadcast %cst_59 : f32 to vector<2x512xf32>
    %149 = arith.maximumf %147, %148 : vector<2x512xf32>
    %150 = arith.truncf %149 : vector<2x512xf32> to vector<2x512xbf16>
    %c0_60 = arith.constant 0 : index
    %c0_61 = arith.constant 0 : index
    %151 = vector.load %arg8[%c0_60, %c0_61] : memref<512x128xbf16, #tpu.memory_space<vmem>>, vector<512x128xbf16>
    %cst_62 = arith.constant dense<0.000000e+00> : vector<2x128xf32>
    %152 = tpu.matmul %150, %151, %cst_62 {dimension_numbers = #tpu.dot_dimension_numbers<[1], [0], [0], [1], [0, 0, 1, 1], [], []>} : vector<2x512xbf16>, vector<512x128xbf16>, vector<2x128xf32> -> vector<2x128xf32>
    %c0_63 = arith.constant 0 : index
    %c0_64 = arith.constant 0 : index
    %153 = vector.load %arg9[%c0_63, %c0_64] : memref<1x128xf32, #tpu.memory_space<vmem>>, vector<1x128xf32>
    %154 = vector.broadcast %153 : vector<1x128xf32> to vector<2x128xf32>
    %155 = arith.addf %152, %154 : vector<2x128xf32>
    %156 = arith.mulf %0, %0 : vector<2x32xf32>
    %cst_65 = arith.constant dense<0.000000e+00> : vector<2xf32>
    %157 = vector.multi_reduction <add>, %156, %cst_65 [1] : vector<2x32xf32> to vector<2xf32>
    %158 = vector.shape_cast %157 : vector<2xf32> to vector<2x1xf32>
    %cst_66 = arith.constant 9.99999993E-9 : f32
    %159 = vector.broadcast %cst_66 : f32 to vector<2x1xf32>
    %160 = arith.addf %158, %159 : vector<2x1xf32>
    %161 = math.rsqrt %160 : vector<2x1xf32>
    %162 = vector.broadcast %161 : vector<2x1xf32> to vector<2x32xf32>
    %163 = arith.mulf %0, %162 : vector<2x32xf32>
    %164 = arith.mulf %136, %136 : vector<2x32xf32>
    %cst_67 = arith.constant dense<0.000000e+00> : vector<2xf32>
    %165 = vector.multi_reduction <add>, %164, %cst_67 [1] : vector<2x32xf32> to vector<2xf32>
    %166 = vector.shape_cast %165 : vector<2xf32> to vector<2x1xf32>
    %cst_68 = arith.constant 9.99999993E-9 : f32
    %167 = vector.broadcast %cst_68 : f32 to vector<2x1xf32>
    %168 = arith.addf %166, %167 : vector<2x1xf32>
    %169 = math.rsqrt %168 : vector<2x1xf32>
    %170 = vector.broadcast %169 : vector<2x1xf32> to vector<2x32xf32>
    %171 = arith.mulf %136, %170 : vector<2x32xf32>
    %172 = arith.truncf %163 : vector<2x32xf32> to vector<2x32xbf16>
    %173 = arith.truncf %171 : vector<2x32xf32> to vector<2x32xbf16>
    %cst_69 = arith.constant dense<0.000000e+00> : vector<2x2xf32>
    %174 = tpu.matmul %172, %173, %cst_69 {dimension_numbers = #tpu.dot_dimension_numbers<[1], [1], [0], [0], [0, 0, 1, 0], [], []>} : vector<2x32xbf16>, vector<2x32xbf16>, vector<2x2xf32> -> vector<2x2xf32>
    %c0_70 = arith.constant 0 : index
    %c0_71 = arith.constant 0 : index
    %175 = vector.load %arg2[%c0_70, %c0_71] : memref<2x128xf32, #tpu.memory_space<vmem>>, vector<2x128xf32>
    %cst_72 = arith.constant dense<0xFF800000> : vector<2xf32>
    %176 = vector.multi_reduction <maximumf>, %155, %cst_72 [1] : vector<2x128xf32> to vector<2xf32>
    %177 = vector.shape_cast %176 : vector<2xf32> to vector<2x1xf32>
    %178 = vector.broadcast %177 : vector<2x1xf32> to vector<2x128xf32>
    %179 = arith.subf %155, %178 : vector<2x128xf32>
    %180 = math.exp %179 : vector<2x128xf32>
    %cst_73 = arith.constant dense<0.000000e+00> : vector<2xf32>
    %181 = vector.multi_reduction <add>, %180, %cst_73 [1] : vector<2x128xf32> to vector<2xf32>
    %182 = vector.shape_cast %181 : vector<2xf32> to vector<2x1xf32>
    %183 = math.log %182 : vector<2x1xf32>
    %184 = arith.addf %183, %177 : vector<2x1xf32>
    %185 = arith.mulf %175, %155 : vector<2x128xf32>
    %cst_74 = arith.constant dense<0.000000e+00> : vector<2xf32>
    %186 = vector.multi_reduction <add>, %185, %cst_74 [1] : vector<2x128xf32> to vector<2xf32>
    %187 = vector.shape_cast %186 : vector<2xf32> to vector<2x1xf32>
    %188 = arith.subf %184, %187 : vector<2x1xf32>
    %cst_75 = arith.constant 0.000000e+00 : f32
    %189 = vector.broadcast %cst_75 : f32 to vector<2x128xf32>
    %190 = arith.maximumf %155, %189 : vector<2x128xf32>
    %cst_76 = arith.constant 1.000000e+00 : f32
    %191 = vector.broadcast %cst_76 : f32 to vector<2x128xf32>
    %192 = arith.addf %190, %191 : vector<2x128xf32>
    %cst_77 = arith.constant dense<0.000000e+00> : vector<2xf32>
    %193 = vector.multi_reduction <add>, %192, %cst_77 [1] : vector<2x128xf32> to vector<2xf32>
    %194 = vector.shape_cast %193 : vector<2xf32> to vector<2x1xf32>
    %cst_78 = arith.constant 1.200000e+02 : f32
    %195 = vector.broadcast %cst_78 : f32 to vector<2x1xf32>
    %196 = arith.subf %194, %195 : vector<2x1xf32>
    %197 = math.log %196 : vector<2x1xf32>
    %198 = math.log %192 : vector<2x128xf32>
    %199 = vector.broadcast %197 : vector<2x1xf32> to vector<2x128xf32>
    %200 = arith.subf %199, %198 : vector<2x128xf32>
    %201 = arith.mulf %175, %200 : vector<2x128xf32>
    %cst_79 = arith.constant dense<0.000000e+00> : vector<2xf32>
    %202 = vector.multi_reduction <add>, %201, %cst_79 [1] : vector<2x128xf32> to vector<2xf32>
    %203 = vector.shape_cast %202 : vector<2xf32> to vector<2x1xf32>
    %204 = tpu.concatenate %188, %203 in 1 : vector<2x1xf32>, vector<2x1xf32> -> vector<2x2xf32>
    %cst_80 = arith.constant dense<0.000000e+00> : vector<2xf32>
    %205 = vector.multi_reduction <add>, %204, %cst_80 [0] : vector<2x2xf32> to vector<2xf32>
    %206 = vector.shape_cast %205 : vector<2xf32> to vector<1x2xf32>
    %cst_81 = arith.constant 5.000000e-01 : f32
    %207 = vector.broadcast %cst_81 : f32 to vector<1x2xf32>
    %208 = arith.mulf %206, %207 : vector<1x2xf32>
    %cst_82 = arith.constant 0.000000e+00 : f32
    %209 = vector.broadcast %cst_82 : f32 to vector<2x126xf32>
    %210 = tpu.concatenate %174, %209 in 1 : vector<2x2xf32>, vector<2x126xf32> -> vector<2x128xf32>
    %cst_83 = arith.constant 0.000000e+00 : f32
    %211 = vector.broadcast %cst_83 : f32 to vector<1x126xf32>
    %212 = tpu.concatenate %208, %211 in 1 : vector<1x2xf32>, vector<1x126xf32> -> vector<1x128xf32>
    %213 = tpu.concatenate %210, %155, %212 in 0 : vector<2x128xf32>, vector<2x128xf32>, vector<1x128xf32> -> vector<5x128xf32>
    %c0_84 = arith.constant 0 : index
    %c0_85 = arith.constant 0 : index
    %214 = vector.load %arg10[%c0_84, %c0_85] : memref<5x128xf32, #tpu.memory_space<vmem>>, vector<5x128xf32>
    tpu.vector_store %arg10[%c0_84, %c0_85], %213 {strides = array<i32>} : memref<5x128xf32, #tpu.memory_space<vmem>>, vector<5x128xf32>,
    return
  }
}

</mosaic_0001>

<llo_original>
// kernel: tpu_custom_call.1
$region0: #{tpu_custom_call.1}
  #allocation0 [shape = 'u32[]', space=smem, size = 0x4, offset = 0x4, fixed_abs, tag = 'smem constant byte address 0x4 - core index']
  #allocation1 [shape = 'u32[144,128]{1,0:T(1,128)}', space=vmem, size = 0x12000, scoped, tag = 'internal scratch']
  %s0 = inlined_call_operand.hbm [shape: f32[2,32], index: 0, kind: input, shape index: {}]
  %s1 = inlined_call_operand.hbm [shape: f32[16,32], index: 1, kind: input, shape index: {}]
  %s2 = inlined_call_operand.vmem [shape: f32[2,128], index: 2, kind: input, shape index: {}]
  %s3 = inlined_call_operand.hbm [shape: f32[9,32], index: 3, kind: input, shape index: {}]
  %s4 = inlined_call_operand.hbm [shape: bf16[3,32,32], index: 4, kind: input, shape index: {}]
  %s5 = inlined_call_operand.hbm [shape: bf16[32,64], index: 5, kind: input, shape index: {}]
  %s6 = inlined_call_operand.hbm [shape: bf16[2,32,512], index: 6, kind: input, shape index: {}]
  %s7 = inlined_call_operand.vmem [shape: f32[1,512], index: 7, kind: input, shape index: {}]
  %s8 = inlined_call_operand.hbm [shape: bf16[512,128], index: 8, kind: input, shape index: {}]
  %s9 = inlined_call_operand.vmem [shape: f32[1,128], index: 9, kind: input, shape index: {}]
  %s10 = inlined_call_operand.hbm [shape: f32[5,128], index: 10, kind: output, shape index: {}]
  %s11 = sld [smem:[#allocation0]]
  $region78: #{tpu_custom_call.1} parent=0
    _
  %s13 = ssub.s32 1, %s11
  %s14 = scalar_select 0, %s13, %s11
  $region1: #{tpu_custom_call.1} parent=0
    #allocation2 [shape = 'u8[1024]{0}', space=vmem, size = 0x400, scoped, tag = 'input window, operand 0, single buffered']
    #allocation3 [shape = 's32[1]{0}', space=sflag, size = 0x4, scoped, tag = 'scoped memory for tpu_custom_call.1']
    #allocation4 [shape = 's32[1]{0}', space=sflag, size = 0x4, scoped, tag = 'scoped memory for tpu_custom_call.1']
    #allocation5 [shape = 'u8[8192]{0}', space=vmem, size = 0x2000, scoped, tag = 'input window, operand 1, single buffered']
    #allocation6 [shape = 's32[1]{0}', space=sflag, size = 0x4, scoped, tag = 'scoped memory for tpu_custom_call.1']
    #allocation7 [shape = 'u8[8192]{0}', space=vmem, size = 0x2000, scoped, tag = 'input window, operand 3, single buffered']
    #allocation8 [shape = 'u8[24576]{0}', space=vmem, size = 0x6000, scoped, tag = 'input window, operand 4, single buffered']
    #allocation9 [shape = 's32[1]{0}', space=sflag, size = 0x4, scoped, tag = 'scoped memory for tpu_custom_call.1']
    #allocation10 [shape = 'u8[8192]{0}', space=vmem, size = 0x2000, scoped, tag = 'input window, operand 5, single buffered']
    #allocation11 [shape = 'u8[65536]{0}', space=vmem, size = 0x10000, scoped, tag = 'input window, operand 6, single buffered']
    #allocation12 [shape = 's32[1]{0}', space=sflag, size = 0x4, scoped, tag = 'scoped memory for tpu_custom_call.1']
    #allocation13 [shape = 'u8[131072]{0}', space=vmem, size = 0x20000, scoped, tag = 'input window, operand 8, single buffered']
    #allocation14 [shape = 'u8[4096]{0}', space=vmem, size = 0x1000, scoped, tag = 'output window, operand 0, single buffered']
    %15 = vsyncpa [#allocation3], 0
    %16 = vsyncpa [#allocation6], 0
    %17 = vsyncpa [#allocation9], 0
    %18 = vsyncpa [#allocation12], 0
    %19 = vsyncpa [#allocation4], 0
    // Predicated region
    $region2: #{tpu_custom_call.1} parent=1 // pred_check
      _
    $region3: #{tpu_custom_call.1} parent=1 // pred_check_branch
      %21 = sbr.rel (0) target = $region5
    $region4: #{tpu_custom_call.1} parent=1 // pred_region
      %s23 = ssub.s32 32, 32
      %24 = vsyncadd [#allocation3], %s23
      %s26 = sshll.u32 [#allocation2], 4
      %s27 = int_to_ptr.vmem [resolvable:$true] %s26
      %29 = dma.hbm_to_vmem [thread:$0]  %s0, 32, %s27, [#allocation3]
    $region5: #{tpu_custom_call.1} parent=1 // pred_fallthru
      _
    // Predicated region
    $region6: #{tpu_custom_call.1} parent=1 // pred_check
      _
    $region7: #{tpu_custom_call.1} parent=1 // pred_check_branch
      %31 = sbr.rel (0) target = $region9
    $region8: #{tpu_custom_call.1} parent=1 // pred_region
      %s33 = ssub.s32 256, 256
      %34 = vsyncadd [#allocation6], %s33
      %s35 = sshll.u32 [#allocation5], 4
      %s36 = int_to_ptr.vmem [resolvable:$true] %s35
      %41 = dma.hbm_to_vmem [thread:$0]  %s1, 256, %s36, [#allocation6], 128, 128, 8
    $region9: #{tpu_custom_call.1} parent=1 // pred_fallthru
      _
    // Predicated region
    $region10: #{tpu_custom_call.1} parent=1 // pred_check
      _
    $region11: #{tpu_custom_call.1} parent=1 // pred_check_branch
      %43 = sbr.rel (0) target = $region13
    $region12: #{tpu_custom_call.1} parent=1 // pred_region
      _
    $region13: #{tpu_custom_call.1} parent=1 // pred_fallthru
      _
    // Predicated region
    $region14: #{tpu_custom_call.1} parent=1 // pred_check
      _
    $region15: #{tpu_custom_call.1} parent=1 // pred_check_branch
      %45 = sbr.rel (0) target = $region17
    $region16: #{tpu_custom_call.1} parent=1 // pred_region
      %s47 = ssub.s32 256, 256
      %48 = vsyncadd [#allocation6], %s47
      %s49 = sshll.u32 [#allocation7], 4
      %s50 = int_to_ptr.vmem [resolvable:$true] %s49
      %55 = dma.hbm_to_vmem [thread:$0]  %s3, 256, %s50, [#allocation6], 128, 128, 8
    $region17: #{tpu_custom_call.1} parent=1 // pred_fallthru
      _
    // Predicated region
    $region18: #{tpu_custom_call.1} parent=1 // pred_check
      _
    $region19: #{tpu_custom_call.1} parent=1 // pred_check_branch
      %57 = sbr.rel (0) target = $region21
    $region20: #{tpu_custom_call.1} parent=1 // pred_region
      %s59 = ssub.s32 768, 768
      %60 = vsyncadd [#allocation9], %s59
      %s61 = sshll.u32 [#allocation8], 4
      %s62 = int_to_ptr.vmem [resolvable:$true] %s61
      %67 = dma.hbm_to_vmem [thread:$0]  %s4, 768, %s62, [#allocation9], 64, 64, 4
    $region21: #{tpu_custom_call.1} parent=1 // pred_fallthru
      _
    // Predicated region
    $region22: #{tpu_custom_call.1} parent=1 // pred_check
      _
    $region23: #{tpu_custom_call.1} parent=1 // pred_check_branch
      %69 = sbr.rel (0) target = $region25
    $region24: #{tpu_custom_call.1} parent=1 // pred_region
      %s71 = ssub.s32 256, 256
      %72 = vsyncadd [#allocation9], %s71
      %s73 = sshll.u32 [#allocation10], 4
      %s74 = int_to_ptr.vmem [resolvable:$true] %s73
      %79 = dma.hbm_to_vmem [thread:$0]  %s5, 256, %s74, [#allocation9], 64, 64, 4
    $region25: #{tpu_custom_call.1} parent=1 // pred_fallthru
      _
    // Predicated region
    $region26: #{tpu_custom_call.1} parent=1 // pred_check
      _
    $region27: #{tpu_custom_call.1} parent=1 // pred_check_branch
      %81 = sbr.rel (0) target = $region29
    $region28: #{tpu_custom_call.1} parent=1 // pred_region
      %s83 = ssub.s32 2048, 2048
      %84 = vsyncadd [#allocation12], %s83
      %s85 = sshll.u32 [#allocation11], 4
      %s86 = int_to_ptr.vmem [resolvable:$true] %s85
      %91 = dma.hbm_to_vmem [thread:$0]  %s6, 2048, %s86, [#allocation12], 256, 256, 16
    $region29: #{tpu_custom_call.1} parent=1 // pred_fallthru
      _
    // Predicated region
    $region30: #{tpu_custom_call.1} parent=1 // pred_check
      _
    $region31: #{tpu_custom_call.1} parent=1 // pred_check_branch
      %93 = sbr.rel (0) target = $region33
    $region32: #{tpu_custom_call.1} parent=1 // pred_region
      _
    $region33: #{tpu_custom_call.1} parent=1 // pred_fallthru
      _
    // Predicated region
    $region34: #{tpu_custom_call.1} parent=1 // pred_check
      _
    $region35: #{tpu_custom_call.1} parent=1 // pred_check_branch
      %95 = sbr.rel (0) target = $region37
    $region36: #{tpu_custom_call.1} parent=1 // pred_region
      %s97 = ssub.s32 4096, 4096
      %98 = vsyncadd [#allocation12], %s97
      %s99 = sshll.u32 [#allocation13], 4
      %s100 = int_to_ptr.vmem [resolvable:$true] %s99
      %105 = dma.hbm_to_vmem [thread:$0]  %s8, 4096, %s100, [#allocation12], 64, 64, 4
    $region37: #{tpu_custom_call.1} parent=1 // pred_fallthru
      _
    // Predicated region
    $region38: #{tpu_custom_call.1} parent=1 // pred_check
      _
    $region39: #{tpu_custom_call.1} parent=1 // pred_check_branch
      %107 = sbr.rel (0) target = $region41
    $region40: #{tpu_custom_call.1} parent=1 // pred_region
      _
    $region41: #{tpu_custom_call.1} parent=1 // pred_fallthru
      _
    // Predicated region
    $region42: #{tpu_custom_call.1} parent=1 // pred_check
      _
    $region43: #{tpu_custom_call.1} parent=1 // pred_check_branch
      %109 = sbr.rel (0) target = $region45
    $region44: #{tpu_custom_call.1} parent=1 // pred_region
      %110 = dma.done [#allocation3], 32
    $region45: #{tpu_custom_call.1} parent=1 // pred_fallthru
      _
    // Predicated region
    $region46: #{tpu_custom_call.1} parent=1 // pred_check
      _
    $region47: #{tpu_custom_call.1} parent=1 // pred_check_branch
      %112 = sbr.rel (0) target = $region49
    $region48: #{tpu_custom_call.1} parent=1 // pred_region
      %113 = dma.done [#allocation6], 256
    $region49: #{tpu_custom_call.1} parent=1 // pred_fallthru
      _
    // Predicated region
    $region50: #{tpu_custom_call.1} parent=1 // pred_check
      _
    $region51: #{tpu_custom_call.1} parent=1 // pred_check_branch
      %115 = sbr.rel (0) target = $region53
    $region52: #{tpu_custom_call.1} parent=1 // pred_region
      %116 = dma.done [#allocation6], 256
    $region53: #{tpu_custom_call.1} parent=1 // pred_fallthru
      _
    // Predicated region
    $region54: #{tpu_custom_call.1} parent=1 // pred_check
      _
    $region55: #{tpu_custom_call.1} parent=1 // pred_check_branch
      %118 = sbr.rel (0) target = $region57
    $region56: #{tpu_custom_call.1} parent=1 // pred_region
      %119 = dma.done [#allocation9], 768
    $region57: #{tpu_custom_call.1} parent=1 // pred_fallthru
      _
    // Predicated region
    $region58: #{tpu_custom_call.1} parent=1 // pred_check
      _
    $region59: #{tpu_custom_call.1} parent=1 // pred_check_branch
      %121 = sbr.rel (0) target = $region61
    $region60: #{tpu_custom_call.1} parent=1 // pred_region
      %122 = dma.done [#allocation9], 256
    $region61: #{tpu_custom_call.1} parent=1 // pred_fallthru
      _
    // Predicated region
    $region62: #{tpu_custom_call.1} parent=1 // pred_check
      _
    $region63: #{tpu_custom_call.1} parent=1 // pred_check_branch
      %124 = sbr.rel (0) target = $region65
    $region64: #{tpu_custom_call.1} parent=1 // pred_region
      %125 = dma.done [#allocation12], 2048
    $region65: #{tpu_custom_call.1} parent=1 // pred_fallthru
      _
    // Predicated region
    $region66: #{tpu_custom_call.1} parent=1 // pred_check
      _
    $region67: #{tpu_custom_call.1} parent=1 // pred_check_branch
      %127 = sbr.rel (0) target = $region69
    $region68: #{tpu_custom_call.1} parent=1 // pred_region
      %128 = dma.done [#allocation12], 4096
    $region69: #{tpu_custom_call.1} parent=1 // pred_fallthru
      _
    %v130 = vld [vmem:[#allocation2] sm:$0x3]
    %v131 = vld [vmem:[#allocation5] sm:$0xff]
    %v132 = vld [vmem:[#allocation5 + $0x8] sm:$0xff]
    %v133 = vld [vmem:[#allocation7] sm:$0x1]
    %v134 = vld [vmem:[#allocation7 + $0x1] sm:$0x1]
    %v135 = vld [vmem:[#allocation7 + $0x2] sm:$0x1]
    %v136 = vld [vmem:[#allocation7 + $0x3] sm:$0x1]
    %v137 = vld [vmem:[#allocation7 + $0x4] sm:$0x1]
    %v138 = vld [vmem:[#allocation7 + $0x5] sm:$0x1]
    %v139 = vld [vmem:[#allocation7 + $0x6] sm:$0x1]
    %v140 = vld [vmem:[#allocation7 + $0x7] sm:$0x1]
    %v141 = vld [vmem:[#allocation7 + $0x8] sm:$0x1]
    %v142 = vpack.c.bf16 %v130, %v130
    %vm143 = vcmask 254976
    %v144 = vsel %vm143, %v130, 0.0
    %145 = vadd.xlane.f32.xlu0 %v144
    %v146 = vpop.xlane.xlu0 %145
    %v147 = vrcp.pop 32.0
    %v148 = vmul.f32 %v146, %v147
    %v149 = vsub.f32 %v130, %v148
    %v150 = vmul.f32 %v149, %v149
    %v151 = vsel %vm143, %v150, 0.0
    %152 = vadd.xlane.f32.xlu0 %v151
    %v153 = vpop.xlane.xlu0 %152
    %v154 = vmul.f32 %v153, %v147
    %v155 = vadd.f32 %v154, 1e-05
    %v156 = vrsqrt.pop %v155
    %v157 = vmul.f32 %v149, %v156
    %v158 = vlaneseq
    %v159 = vshrl.u32 %v158, 7
    %v160 = vsub.s32 0, %v159
    %v161 = vrot.slane %v133, %v160
    %v162 = vmul.f32 %v157, %v161
    %v163 = vlaneseq
    %v164 = vshrl.u32 %v163, 7
    %v165 = vsub.s32 0, %v164
    %v166 = vrot.slane %v134, %v165
    %v167 = vadd.f32 %v162, %v166
    %vm168 = vcmask 261120
    %v169 = vsel %vm168, %v131, 0.0
    %170 = vadd.xlane.f32.xlu0 %v169
    %v171 = vpop.xlane.xlu0 %170
    %v172 = vsel %vm168, %v132, 0.0
    %173 = vadd.xlane.f32.xlu0 %v172
    %v174 = vpop.xlane.xlu0 %173
    %v175 = vmul.f32 %v171, %v147
    %v176 = vmul.f32 %v174, %v147
    %v177 = vsub.f32 %v131, %v175
    %v178 = vsub.f32 %v132, %v176
    %v179 = vmul.f32 %v177, %v177
    %v180 = vmul.f32 %v178, %v178
    %v181 = vsel %vm168, %v179, 0.0
    %182 = vadd.xlane.f32.xlu0 %v181
    %v183 = vpop.xlane.xlu0 %182
    %v184 = vsel %vm168, %v180, 0.0
    %185 = vadd.xlane.f32.xlu0 %v184
    %v186 = vpop.xlane.xlu0 %185
    %v187 = vmul.f32 %v183, %v147
    %v188 = vmul.f32 %v186, %v147
    %v189 = vadd.f32 %v187, 1e-05
    %v190 = vadd.f32 %v188, 1e-05
    %v191 = vrsqrt.pop %v189
    %v192 = vrsqrt.pop %v190
    %v193 = vmul.f32 %v177, %v191
    %v194 = vmul.f32 %v178, %v192
    %v195 = vmul.f32 %v193, %v161
    %v196 = vmul.f32 %v194, %v161
    %v197 = vadd.f32 %v195, %v166
    %v198 = vadd.f32 %v196, %v166
    %v199 = vpack.c.bf16 %v167, %v167
    %v200 = vpack.c.bf16 %v198, %v197
    %v201 = vld [vmem:[#allocation8] sm:$0xf]
    %v202 = vld [vmem:[#allocation8 + $0x4] sm:$0xf]
    %v203 = vld [vmem:[#allocation8 + $0x8] sm:$0xf]
    %v204 = vld [vmem:[#allocation8 + $0xc] sm:$0xf]
    %v205 = vlaneseq
    %v206 = vshrl.u32 %v205, 7
    %v207 = vsub.s32 0, %v206
    %v208 = vrot.slane %v137, %v207
    %v213 = vunpack.c.l.b16 %v201
    %v214 = vunpack.c.l.b16 %v202
    %v215 = vunpack.c.l.b16 %v203
    %v216 = vunpack.c.l.b16 %v204
    %v217 = vpack.c.b16 %v214, %v213
    %v218 = vpack.c.b16 %v216, %v215
    %v222 = vsel %vm168, %v199, 0
    %224 = vmatprep.subr.bf16.mxu0 0
    %225 = vmatpush1.bf16.msra.mxu0 0
    %226 = vmatprep.subr.bf16.mxu0 0
    %227 = vmatpush1.bf16.msra.mxu0 0
    %228 = vmatprep.subr.bf16.mxu0 0
    %229 = vmatpush1.bf16.msra.mxu0 0
    %230 = vmatprep.subr.bf16.mxu0 0
    %231 = vmatpush1.bf16.msra.mxu0 0
    %232 = vmatprep.subr.bf16.mxu0 0
    %233 = vmatpush1.bf16.msra.mxu0 0
    %234 = vmatprep.subr.bf16.mxu0 0
    %235 = vmatpush1.bf16.msra.mxu0 0
    %236 = vmatprep.subr.bf16.mxu0 0
    %237 = vmatpush1.bf16.msra.mxu0 %v218
    %238 = vmatprep.subr.bf16.mxu0 0
    %239 = vmatpush1.bf16.msra.mxu0 %v217
    %240 = vmatprep.subr.bf16.mxu0 0
    %241 = vmatpush2.bf16.msra.mxu0 0
    %242 = vmatprep.subr.bf16.mxu0 0
    %243 = vmatpush2.bf16.msra.mxu0 0
    %244 = vmatprep.subr.bf16.mxu0 0
    %245 = vmatpush2.bf16.msra.mxu0 0
    %246 = vmatprep.subr.bf16.mxu0 0
    %247 = vmatpush2.bf16.msra.mxu0 0
    %248 = vmatprep.subr.bf16.mxu0 0
    %249 = vmatpush2.bf16.msra.mxu0 0
    %250 = vmatprep.subr.bf16.mxu0 0
    %251 = vmatpush2.bf16.msra.mxu0 0
    %252 = vmatprep.subr.bf16.mxu0 0
    %253 = vmatpush2.bf16.msra.mxu0 0
    %254 = vmatprep.subr.bf16.mxu0 0
    %255 = vmatpush2.bf16.msra.mxu0 0
    %256 = vmatprep.mubr.bf16.mxu0 0
    %257 = vmatmul.mubr.bf16.gmra.mxu0 %v222
    %v258 = vpop.f32.mrf.mxu0
    %v259 = vadd.f32 %v208, %v258
    %v260 = vpop.f32.mrf.mxu0
    %v261 = vpop.f32.mrf.mxu0
    %v262 = vpop.f32.mrf.mxu0
    %263 = vdwg.mxu0
    %v264 = vld [vmem:[#allocation10] sm:$0xf]
    %v265 = vld [vmem:[#allocation10 + $0x4] sm:$0xf]
    %v266 = vld [vmem:[#allocation10 + $0x8] sm:$0xf]
    %v267 = vld [vmem:[#allocation10 + $0xc] sm:$0xf]
    %v272 = vunpack.c.l.b16 %v264
    %v273 = vunpack.c.l.b16 %v265
    %v274 = vunpack.c.l.b16 %v266
    %v275 = vunpack.c.l.b16 %v267
    %v276 = vpack.c.b16 %v273, %v272
    %v277 = vpack.c.b16 %v275, %v274
    %v281 = vsel %vm168, %v200, 0
    %283 = vmatprep.subr.bf16.mxu0 0
    %284 = vmatpush1.bf16.msra.mxu0 0
    %285 = vmatprep.subr.bf16.mxu0 0
    %286 = vmatpush1.bf16.msra.mxu0 0
    %287 = vmatprep.subr.bf16.mxu0 0
    %288 = vmatpush1.bf16.msra.mxu0 0
    %289 = vmatprep.subr.bf16.mxu0 0
    %290 = vmatpush1.bf16.msra.mxu0 0
    %291 = vmatprep.subr.bf16.mxu0 0
    %292 = vmatpush1.bf16.msra.mxu0 0
    %293 = vmatprep.subr.bf16.mxu0 0
    %294 = vmatpush1.bf16.msra.mxu0 0
    %295 = vmatprep.subr.bf16.mxu0 0
    %296 = vmatpush1.bf16.msra.mxu0 %v277
    %297 = vmatprep.subr.bf16.mxu0 0
    %298 = vmatpush1.bf16.msra.mxu0 %v276
    %299 = vmatprep.subr.bf16.mxu0 0
    %300 = vmatpush2.bf16.msra.mxu0 0
    %301 = vmatprep.subr.bf16.mxu0 0
    %302 = vmatpush2.bf16.msra.mxu0 0
    %303 = vmatprep.subr.bf16.mxu0 0
    %304 = vmatpush2.bf16.msra.mxu0 0
    %305 = vmatprep.subr.bf16.mxu0 0
    %306 = vmatpush2.bf16.msra.mxu0 0
    %307 = vmatprep.subr.bf16.mxu0 0
    %308 = vmatpush2.bf16.msra.mxu0 0
    %309 = vmatprep.subr.bf16.mxu0 0
    %310 = vmatpush2.bf16.msra.mxu0 0
    %311 = vmatprep.subr.bf16.mxu0 0
    %312 = vmatpush2.bf16.msra.mxu0 0
    %313 = vmatprep.subr.bf16.mxu0 0
    %314 = vmatpush2.bf16.msra.mxu0 0
    %315 = vmatprep.mubr.bf16.mxu0 0
    %316 = vmatmul.mubr.bf16.gmra.mxu0 %v281
    %v317 = vpop.f32.mrf.mxu0
    %v318 = vadd.f32 0.0, %v317
    %v319 = vpop.f32.mrf.mxu0
    %v320 = vpop.f32.mrf.mxu0
    %v321 = vadd.f32 0.0, %v320
    %v322 = vpop.f32.mrf.mxu0
    %323 = vdwg.mxu0
    %v324 = vlaneseq
    %v325 = vshrl.u32 %v324, 7
    %v326 = vsub.s32 0, %v325
    %v327 = vrot.slane %v138, %v326
    %v328 = vadd.f32 %v318, %v327
    %v329 = vadd.f32 %v321, %v327
    %v330 = vlaneseq
    %v331 = vshrl.u32 %v330, 7
    %v332 = vsub.s32 0, %v331
    %v333 = vrot.slane %v139, %v332
    %335 = vrot.lane.b32.xlu0 %v333, 32
    %v336 = vpop.permute.xlu0 %335
    %v338 = vadd.f32 %v318, %v336
    %v339 = vadd.f32 %v321, %v336
    %v340 = vpack.c.bf16 %v339, %v338
    %v341 = vpack.c.bf16 %v259, %v259
    %v342 = vpack.c.bf16 %v329, %v328
    %v344 = vsel %vm168, %v341, 0
    %v347 = vsel %vm168, %v342, 0
    %349 = vmatprep.subr.bf16.mxu0 0
    %350 = vmatpush1.bf16.xpose.msra.mxu0 0
    %351 = vmatprep.subr.bf16.mxu0 0
    %352 = vmatpush1.bf16.xpose.msra.mxu0 0
    %353 = vmatprep.subr.bf16.mxu0 0
    %354 = vmatpush1.bf16.xpose.msra.mxu0 0
    %355 = vmatprep.subr.bf16.mxu0 0
    %356 = vmatpush1.bf16.xpose.msra.mxu0 0
    %357 = vmatprep.subr.bf16.mxu0 0
    %358 = vmatpush1.bf16.xpose.msra.mxu0 0
    %359 = vmatprep.subr.bf16.mxu0 0
    %360 = vmatpush1.bf16.xpose.msra.mxu0 0
    %361 = vmatprep.subr.bf16.mxu0 0
    %362 = vmatpush1.bf16.xpose.msra.mxu0 0
    %363 = vmatprep.subr.bf16.mxu0 0
    %364 = vmatpush1.bf16.xpose.msra.mxu0 %v347
    %365 = vmatprep.subr.bf16.mxu0 0
    %366 = vmatpush2.bf16.xpose.msra.mxu0 0
    %367 = vmatprep.subr.bf16.mxu0 0
    %368 = vmatpush2.bf16.xpose.msra.mxu0 0
    %369 = vmatprep.subr.bf16.mxu0 0
    %370 = vmatpush2.bf16.xpose.msra.mxu0 0
    %371 = vmatprep.subr.bf16.mxu0 0
    %372 = vmatpush2.bf16.xpose.msra.mxu0 0
    %373 = vmatprep.subr.bf16.mxu0 0
    %374 = vmatpush2.bf16.xpose.msra.mxu0 0
    %375 = vmatprep.subr.bf16.mxu0 0
    %376 = vmatpush2.bf16.xpose.msra.mxu0 0
    %377 = vmatprep.subr.bf16.mxu0 0
    %378 = vmatpush2.bf16.xpose.msra.mxu0 0
    %379 = vmatprep.subr.bf16.mxu0 0
    %380 = vmatpush2.bf16.xpose.msra.mxu0 0
    %381 = vmatprep.mubr.bf16.mxu0 0
    %382 = vmatmul.mubr.bf16.gmra.mxu0 %v344
    %v383 = vpop.f32.mrf.mxu0
    %v384 = vadd.f32 0.0, %v383
    %v385 = vpop.f32.mrf.mxu0
    %v386 = vpop.f32.mrf.mxu0
    %v387 = vpop.f32.mrf.mxu0
    %388 = vdwg.mxu0
    %v389 = vmul.f32 %v384, 0.17677669
    %v390 = vlaneseq
    %v391 = vshrl.u32 %v390, 7
    %v392 = vlaneseq
    %v393 = vand.u32 %v392, 127
    %v394 = vmul.u32 %v391, 8
    %vm395 = vcmp.ge.s32.totalorder %v393, %v394
    %v396 = vadd.s32 %v391, 1
    %v397 = vmul.u32 %v396, 8
    %vm398 = vcmp.lt.s32.totalorder %v393, %v397
    %vm399 = vmand %vm395, %vm398
    %v400 = vsel %vm399, %v389, -1e+30
    %vm401 = vcmask 123904
    %v402 = vsel %vm401, %v400, -inf
    %403 = vmax.xlane.f32.xlu0 %v402
    %v404 = vpop.xlane.xlu0 %403
    %v405 = vsub.f32 %v400, %v404
    %v406 = vmul.f32 %v405, 1.442695
    %v407 = vpow.pop %v406
    %v408 = vsel %vm401, %v407, 0.0
    %409 = vadd.xlane.f32.xlu0 %v408
    %v410 = vpop.xlane.xlu0 %409
    %v411 = vrcp.pop %v410
    %v412 = vmul.f32 %v407, %v411
    %v413 = vpack.c.bf16 %v412, %v412
    %415 = vrot.lane.b32.xlu0 %v340, 96
    %v416 = vpop.permute.xlu0 %415
    %vm418 = vcmask 130048
    %v420 = vsel %vm418, %v413, 0
    %422 = vmatprep.subr.bf16.mxu0 0
    %423 = vmatpush1.bf16.msra.mxu0 0
    %424 = vmatprep.subr.bf16.mxu0 0
    %425 = vmatpush1.bf16.msra.mxu0 0
    %426 = vmatprep.subr.bf16.mxu0 0
    %427 = vmatpush1.bf16.msra.mxu0 0
    %428 = vmatprep.subr.bf16.mxu0 0
    %429 = vmatpush1.bf16.msra.mxu0 0
    %430 = vmatprep.subr.bf16.mxu0 0
    %431 = vmatpush1.bf16.msra.mxu0 0
    %432 = vmatprep.subr.bf16.mxu0 0
    %433 = vmatpush1.bf16.msra.mxu0 0
    %434 = vmatprep.subr.bf16.mxu0 0
    %435 = vmatpush1.bf16.msra.mxu0 0
    %436 = vmatprep.subr.bf16.mxu0 0
    %437 = vmatpush1.bf16.msra.mxu0 %v416
    %438 = vmatprep.subr.bf16.mxu0 0
    %439 = vmatpush2.bf16.msra.mxu0 0
    %440 = vmatprep.subr.bf16.mxu0 0
    %441 = vmatpush2.bf16.msra.mxu0 0
    %442 = vmatprep.subr.bf16.mxu0 0
    %443 = vmatpush2.bf16.msra.mxu0 0
    %444 = vmatprep.subr.bf16.mxu0 0
    %445 = vmatpush2.bf16.msra.mxu0 0
    %446 = vmatprep.subr.bf16.mxu0 0
    %447 = vmatpush2.bf16.msra.mxu0 0
    %448 = vmatprep.subr.bf16.mxu0 0
    %449 = vmatpush2.bf16.msra.mxu0 0
    %450 = vmatprep.subr.bf16.mxu0 0
    %451 = vmatpush2.bf16.msra.mxu0 0
    %452 = vmatprep.subr.bf16.mxu0 0
    %453 = vmatpush2.bf16.msra.mxu0 0
    %454 = vmatprep.mubr.bf16.mxu0 0
    %455 = vmatmul.mubr.bf16.gmra.mxu0 %v420
    %v456 = vpop.f32.mrf.mxu0
    %v457 = vadd.f32 0.0, %v456
    %v458 = vpop.f32.mrf.mxu0
    %v459 = vpop.f32.mrf.mxu0
    %v460 = vpop.f32.mrf.mxu0
    %461 = vdwg.mxu0
    %v462 = vpack.c.bf16 %v457, %v457
    %s463 = scalar_lea.vmem [#allocation8], 16
    %v464 = vld [vmem:[%s463] sm:$0xf]
    %v465 = vld [vmem:[%s463 + $0x4] sm:$0xf]
    %v466 = vld [vmem:[%s463 + $0x8] sm:$0xf]
    %v467 = vld [vmem:[%s463 + $0xc] sm:$0xf]
    %v468 = vlaneseq
    %v469 = vshrl.u32 %v468, 7
    %v470 = vsub.s32 0, %v469
    %v471 = vrot.slane %v140, %v470
    %v476 = vunpack.c.l.b16 %v464
    %v477 = vunpack.c.l.b16 %v465
    %v478 = vunpack.c.l.b16 %v466
    %v479 = vunpack.c.l.b16 %v467
    %v480 = vpack.c.b16 %v477, %v476
    %v481 = vpack.c.b16 %v479, %v478
    %v485 = vsel %vm168, %v462, 0
    %487 = vmatprep.subr.bf16.mxu0 0
    %488 = vmatpush1.bf16.msra.mxu0 0
    %489 = vmatprep.subr.bf16.mxu0 0
    %490 = vmatpush1.bf16.msra.mxu0 0
    %491 = vmatprep.subr.bf16.mxu0 0
    %492 = vmatpush1.bf16.msra.mxu0 0
    %493 = vmatprep.subr.bf16.mxu0 0
    %494 = vmatpush1.bf16.msra.mxu0 0
    %495 = vmatprep.subr.bf16.mxu0 0
    %496 = vmatpush1.bf16.msra.mxu0 0
    %497 = vmatprep.subr.bf16.mxu0 0
    %498 = vmatpush1.bf16.msra.mxu0 0
    %499 = vmatprep.subr.bf16.mxu0 0
    %500 = vmatpush1.bf16.msra.mxu0 %v481
    %501 = vmatprep.subr.bf16.mxu0 0
    %502 = vmatpush1.bf16.msra.mxu0 %v480
    %503 = vmatprep.subr.bf16.mxu0 0
    %504 = vmatpush2.bf16.msra.mxu0 0
    %505 = vmatprep.subr.bf16.mxu0 0
    %506 = vmatpush2.bf16.msra.mxu0 0
    %507 = vmatprep.subr.bf16.mxu0 0
    %508 = vmatpush2.bf16.msra.mxu0 0
    %509 = vmatprep.subr.bf16.mxu0 0
    %510 = vmatpush2.bf16.msra.mxu0 0
    %511 = vmatprep.subr.bf16.mxu0 0
    %512 = vmatpush2.bf16.msra.mxu0 0
    %513 = vmatprep.subr.bf16.mxu0 0
    %514 = vmatpush2.bf16.msra.mxu0 0
    %515 = vmatprep.subr.bf16.mxu0 0
    %516 = vmatpush2.bf16.msra.mxu0 0
    %517 = vmatprep.subr.bf16.mxu0 0
    %518 = vmatpush2.bf16.msra.mxu0 0
    %519 = vmatprep.mubr.bf16.mxu0 0
    %520 = vmatmul.mubr.bf16.gmra.mxu0 %v485
    %v521 = vpop.f32.mrf.mxu0
    %v522 = vadd.f32 %v471, %v521
    %v523 = vpop.f32.mrf.mxu0
    %v524 = vpop.f32.mrf.mxu0
    %v525 = vpop.f32.mrf.mxu0
    %526 = vdwg.mxu0
    %v527 = vpack.c.bf16 %v522, %v522
    %s528 = scalar_lea.vmem [#allocation8], 32
    %v529 = vld [vmem:[%s528] sm:$0xf]
    %v530 = vld [vmem:[%s528 + $0x4] sm:$0xf]
    %v531 = vld [vmem:[%s528 + $0x8] sm:$0xf]
    %v532 = vld [vmem:[%s528 + $0xc] sm:$0xf]
    %v533 = vlaneseq
    %v534 = vshrl.u32 %v533, 7
    %v535 = vsub.s32 0, %v534
    %v536 = vrot.slane %v141, %v535
    %v541 = vunpack.c.l.b16 %v529
    %v542 = vunpack.c.l.b16 %v530
    %v543 = vunpack.c.l.b16 %v531
    %v544 = vunpack.c.l.b16 %v532
    %v545 = vpack.c.b16 %v542, %v541
    %v546 = vpack.c.b16 %v544, %v543
    %v550 = vsel %vm168, %v527, 0
    %552 = vmatprep.subr.bf16.mxu0 0
    %553 = vmatpush1.bf16.msra.mxu0 0
    %554 = vmatprep.subr.bf16.mxu0 0
    %555 = vmatpush1.bf16.msra.mxu0 0
    %556 = vmatprep.subr.bf16.mxu0 0
    %557 = vmatpush1.bf16.msra.mxu0 0
    %558 = vmatprep.subr.bf16.mxu0 0
    %559 = vmatpush1.bf16.msra.mxu0 0
    %560 = vmatprep.subr.bf16.mxu0 0
    %561 = vmatpush1.bf16.msra.mxu0 0
    %562 = vmatprep.subr.bf16.mxu0 0
    %563 = vmatpush1.bf16.msra.mxu0 0
    %564 = vmatprep.subr.bf16.mxu0 0
    %565 = vmatpush1.bf16.msra.mxu0 %v546
    %566 = vmatprep.subr.bf16.mxu0 0
    %567 = vmatpush1.bf16.msra.mxu0 %v545
    %568 = vmatprep.subr.bf16.mxu0 0
    %569 = vmatpush2.bf16.msra.mxu0 0
    %570 = vmatprep.subr.bf16.mxu0 0
    %571 = vmatpush2.bf16.msra.mxu0 0
    %572 = vmatprep.subr.bf16.mxu0 0
    %573 = vmatpush2.bf16.msra.mxu0 0
    %574 = vmatprep.subr.bf16.mxu0 0
    %575 = vmatpush2.bf16.msra.mxu0 0
    %576 = vmatprep.subr.bf16.mxu0 0
    %577 = vmatpush2.bf16.msra.mxu0 0
    %578 = vmatprep.subr.bf16.mxu0 0
    %579 = vmatpush2.bf16.msra.mxu0 0
    %580 = vmatprep.subr.bf16.mxu0 0
    %581 = vmatpush2.bf16.msra.mxu0 0
    %582 = vmatprep.subr.bf16.mxu0 0
    %583 = vmatpush2.bf16.msra.mxu0 0
    %584 = vmatprep.mubr.bf16.mxu0 0
    %585 = vmatmul.mubr.bf16.gmra.mxu0 %v550
    %v586 = vpop.f32.mrf.mxu0
    %v587 = vadd.f32 %v536, %v586
    %v588 = vpop.f32.mrf.mxu0
    %v589 = vpop.f32.mrf.mxu0
    %v590 = vpop.f32.mrf.mxu0
    %591 = vdwg.mxu0
    %v592 = vadd.f32 %v522, %v587
    %v593 = vsel %vm143, %v592, 0.0
    %594 = vadd.xlane.f32.xlu0 %v593
    %v595 = vpop.xlane.xlu0 %594
    %v596 = vmul.f32 %v595, %v147
    %v597 = vsub.f32 %v592, %v596
    %v598 = vmul.f32 %v597, %v597
    %v599 = vsel %vm143, %v598, 0.0
    %600 = vadd.xlane.f32.xlu0 %v599
    %v601 = vpop.xlane.xlu0 %600
    %v602 = vmul.f32 %v601, %v147
    %v603 = vadd.f32 %v602, 1e-05
    %v604 = vrsqrt.pop %v603
    %v605 = vmul.f32 %v597, %v604
    %v606 = vlaneseq
    %v607 = vshrl.u32 %v606, 7
    %v608 = vsub.s32 0, %v607
    %v609 = vrot.slane %v135, %v608
    %v610 = vmul.f32 %v605, %v609
    %v611 = vlaneseq
    %v612 = vshrl.u32 %v611, 7
    %v613 = vsub.s32 0, %v612
    %v614 = vrot.slane %v136, %v613
    %v615 = vadd.f32 %v610, %v614
    %v616 = vpack.c.bf16 %v615, %v615
    %v617 = vld [vmem:[#allocation11] sm:$0xff]
    %v618 = vld [vmem:[#allocation11 + $0x8] sm:$0xff]
    %v619 = vld [vmem:[#allocation11 + $0x10] sm:$0xff]
    %v620 = vld [vmem:[#allocation11 + $0x18] sm:$0xff]
    %v621 = vld [vmem:[#allocation11 + $0x20] sm:$0xff]
    %v622 = vld [vmem:[#allocation11 + $0x28] sm:$0xff]
    %v623 = vld [vmem:[#allocation11 + $0x30] sm:$0xff]
    %v624 = vld [vmem:[#allocation11 + $0x38] sm:$0xff]
    %s625 = scalar_lea.vmem [#allocation11], 64
    %v626 = vld [vmem:[%s625] sm:$0xff]
    %v627 = vld [vmem:[%s625 + $0x8] sm:$0xff]
    %v628 = vld [vmem:[%s625 + $0x10] sm:$0xff]
    %v629 = vld [vmem:[%s625 + $0x18] sm:$0xff]
    %v630 = vld [vmem:[%s625 + $0x20] sm:$0xff]
    %v631 = vld [vmem:[%s625 + $0x28] sm:$0xff]
    %v632 = vld [vmem:[%s625 + $0x30] sm:$0xff]
    %v633 = vld [vmem:[%s625 + $0x38] sm:$0xff]
    %v642 = vunpack.c.l.b16 %v626
    %v643 = vunpack.c.h.b16 %v626
    %v644 = vunpack.c.l.b16 %v627
    %v645 = vunpack.c.h.b16 %v627
    %v646 = vunpack.c.l.b16 %v628
    %v647 = vunpack.c.h.b16 %v628
    %v648 = vunpack.c.l.b16 %v629
    %v649 = vunpack.c.h.b16 %v629
    %v650 = vunpack.c.l.b16 %v630
    %v651 = vunpack.c.h.b16 %v630
    %v652 = vunpack.c.l.b16 %v631
    %v653 = vunpack.c.h.b16 %v631
    %v654 = vunpack.c.l.b16 %v632
    %v655 = vunpack.c.h.b16 %v632
    %v656 = vunpack.c.l.b16 %v633
    %v657 = vunpack.c.h.b16 %v633
    %v658 = vpack.c.b16 %v646, %v642
    %v659 = vpack.c.b16 %v647, %v643
    %v660 = vpack.c.b16 %v648, %v644
    %v661 = vpack.c.b16 %v649, %v645
    %v662 = vpack.c.b16 %v654, %v650
    %v663 = vpack.c.b16 %v655, %v651
    %v664 = vpack.c.b16 %v656, %v652
    %v665 = vpack.c.b16 %v657, %v653
    %v675 = vsel %vm168, %v616, 0
    %677 = vmatprep.subr.bf16.mxu0 0
    %678 = vmatpush1.bf16.msra.mxu0 0
    %679 = vmatprep.subr.bf16.mxu0 0
    %680 = vmatpush1.bf16.msra.mxu0 0
    %681 = vmatprep.subr.bf16.mxu0 0
    %682 = vmatpush1.bf16.msra.mxu0 0
    %683 = vmatprep.subr.bf16.mxu0 0
    %684 = vmatpush1.bf16.msra.mxu0 0
    %685 = vmatprep.subr.bf16.mxu0 0
    %686 = vmatpush1.bf16.msra.mxu0 0
    %687 = vmatprep.subr.bf16.mxu0 0
    %688 = vmatpush1.bf16.msra.mxu0 0
    %689 = vmatprep.subr.bf16.mxu0 %v663
    %690 = vmatpush1.bf16.msra.mxu0 %v662
    %691 = vmatprep.subr.bf16.mxu0 %v659
    %692 = vmatpush1.bf16.msra.mxu0 %v658
    %693 = vmatprep.subr.bf16.mxu0 0
    %694 = vmatpush2.bf16.msra.mxu0 0
    %695 = vmatprep.subr.bf16.mxu0 0
    %696 = vmatpush2.bf16.msra.mxu0 0
    %697 = vmatprep.subr.bf16.mxu0 0
    %698 = vmatpush2.bf16.msra.mxu0 0
    %699 = vmatprep.subr.bf16.mxu0 0
    %700 = vmatpush2.bf16.msra.mxu0 0
    %701 = vmatprep.subr.bf16.mxu0 0
    %702 = vmatpush2.bf16.msra.mxu0 0
    %703 = vmatprep.subr.bf16.mxu0 0
    %704 = vmatpush2.bf16.msra.mxu0 0
    %705 = vmatprep.subr.bf16.mxu0 0
    %706 = vmatpush2.bf16.msra.mxu0 0
    %707 = vmatprep.subr.bf16.mxu0 0
    %708 = vmatpush2.bf16.msra.mxu0 0
    %709 = vmatprep.mubr.bf16.mxu0 0
    %710 = vmatmul.mubr.bf16.gmra.mxu0 %v675
    %v711 = vpop.f32.mrf.mxu0
    %v712 = vadd.f32 0.0, %v711
    %v713 = vpop.f32.mrf.mxu0
    %v714 = vadd.f32 0.0, %v713
    %v715 = vpop.f32.mrf.mxu0
    %v716 = vpop.f32.mrf.mxu0
    %717 = vdwg.mxu0
    %718 = vmatprep.subr.bf16.mxu0 0
    %719 = vmatpush1.bf16.msra.mxu0 0
    %720 = vmatprep.subr.bf16.mxu0 0
    %721 = vmatpush1.bf16.msra.mxu0 0
    %722 = vmatprep.subr.bf16.mxu0 0
    %723 = vmatpush1.bf16.msra.mxu0 0
    %724 = vmatprep.subr.bf16.mxu0 0
    %725 = vmatpush1.bf16.msra.mxu0 0
    %726 = vmatprep.subr.bf16.mxu0 0
    %727 = vmatpush1.bf16.msra.mxu0 0
    %728 = vmatprep.subr.bf16.mxu0 0
    %729 = vmatpush1.bf16.msra.mxu0 0
    %730 = vmatprep.subr.bf16.mxu0 %v665
    %731 = vmatpush1.bf16.msra.mxu0 %v664
    %732 = vmatprep.subr.bf16.mxu0 %v661
    %733 = vmatpush1.bf16.msra.mxu0 %v660
    %734 = vmatprep.subr.bf16.mxu0 0
    %735 = vmatpush2.bf16.msra.mxu0 0
    %736 = vmatprep.subr.bf16.mxu0 0
    %737 = vmatpush2.bf16.msra.mxu0 0
    %738 = vmatprep.subr.bf16.mxu0 0
    %739 = vmatpush2.bf16.msra.mxu0 0
    %740 = vmatprep.subr.bf16.mxu0 0
    %741 = vmatpush2.bf16.msra.mxu0 0
    %742 = vmatprep.subr.bf16.mxu0 0
    %743 = vmatpush2.bf16.msra.mxu0 0
    %744 = vmatprep.subr.bf16.mxu0 0
    %745 = vmatpush2.bf16.msra.mxu0 0
    %746 = vmatprep.subr.bf16.mxu0 0
    %747 = vmatpush2.bf16.msra.mxu0 0
    %748 = vmatprep.subr.bf16.mxu0 0
    %749 = vmatpush2.bf16.msra.mxu0 0
    %750 = vmatprep.mubr.bf16.mxu0 0
    %751 = vmatmul.mubr.bf16.gmra.mxu0 %v675
    %v752 = vpop.f32.mrf.mxu0
    %v753 = vadd.f32 0.0, %v752
    %v754 = vpop.f32.mrf.mxu0
    %v755 = vadd.f32 0.0, %v754
    %v756 = vpop.f32.mrf.mxu0
    %v757 = vpop.f32.mrf.mxu0
    %758 = vdwg.mxu0
    %v767 = vunpack.c.l.b16 %v617
    %v768 = vunpack.c.h.b16 %v617
    %v769 = vunpack.c.l.b16 %v618
    %v770 = vunpack.c.h.b16 %v618
    %v771 = vunpack.c.l.b16 %v619
    %v772 = vunpack.c.h.b16 %v619
    %v773 = vunpack.c.l.b16 %v620
    %v774 = vunpack.c.h.b16 %v620
    %v775 = vunpack.c.l.b16 %v621
    %v776 = vunpack.c.h.b16 %v621
    %v777 = vunpack.c.l.b16 %v622
    %v778 = vunpack.c.h.b16 %v622
    %v779 = vunpack.c.l.b16 %v623
    %v780 = vunpack.c.h.b16 %v623
    %v781 = vunpack.c.l.b16 %v624
    %v782 = vunpack.c.h.b16 %v624
    %v783 = vpack.c.b16 %v771, %v767
    %v784 = vpack.c.b16 %v772, %v768
    %v785 = vpack.c.b16 %v773, %v769
    %v786 = vpack.c.b16 %v774, %v770
    %v787 = vpack.c.b16 %v779, %v775
    %v788 = vpack.c.b16 %v780, %v776
    %v789 = vpack.c.b16 %v781, %v777
    %v790 = vpack.c.b16 %v782, %v778
    %v800 = vsel %vm168, %v142, 0
    %802 = vmatprep.subr.bf16.mxu0 0
    %803 = vmatpush1.bf16.msra.mxu0 0
    %804 = vmatprep.subr.bf16.mxu0 0
    %805 = vmatpush1.bf16.msra.mxu0 0
    %806 = vmatprep.subr.bf16.mxu0 0
    %807 = vmatpush1.bf16.msra.mxu0 0
    %808 = vmatprep.subr.bf16.mxu0 0
    %809 = vmatpush1.bf16.msra.mxu0 0
    %810 = vmatprep.subr.bf16.mxu0 0
    %811 = vmatpush1.bf16.msra.mxu0 0
    %812 = vmatprep.subr.bf16.mxu0 0
    %813 = vmatpush1.bf16.msra.mxu0 0
    %814 = vmatprep.subr.bf16.mxu0 %v788
    %815 = vmatpush1.bf16.msra.mxu0 %v787
    %816 = vmatprep.subr.bf16.mxu0 %v784
    %817 = vmatpush1.bf16.msra.mxu0 %v783
    %818 = vmatprep.subr.bf16.mxu0 0
    %819 = vmatpush2.bf16.msra.mxu0 0
    %820 = vmatprep.subr.bf16.mxu0 0
    %821 = vmatpush2.bf16.msra.mxu0 0
    %822 = vmatprep.subr.bf16.mxu0 0
    %823 = vmatpush2.bf16.msra.mxu0 0
    %824 = vmatprep.subr.bf16.mxu0 0
    %825 = vmatpush2.bf16.msra.mxu0 0
    %826 = vmatprep.subr.bf16.mxu0 0
    %827 = vmatpush2.bf16.msra.mxu0 0
    %828 = vmatprep.subr.bf16.mxu0 0
    %829 = vmatpush2.bf16.msra.mxu0 0
    %830 = vmatprep.subr.bf16.mxu0 0
    %831 = vmatpush2.bf16.msra.mxu0 0
    %832 = vmatprep.subr.bf16.mxu0 0
    %833 = vmatpush2.bf16.msra.mxu0 0
    %834 = vmatprep.mubr.bf16.mxu0 0
    %835 = vmatmul.mubr.bf16.gmra.mxu0 %v800
    %v836 = vpop.f32.mrf.mxu0
    %v837 = vadd.f32 %v712, %v836
    %v838 = vpop.f32.mrf.mxu0
    %v839 = vadd.f32 %v714, %v838
    %v840 = vpop.f32.mrf.mxu0
    %v841 = vpop.f32.mrf.mxu0
    %842 = vdwg.mxu0
    %843 = vmatprep.subr.bf16.mxu0 0
    %844 = vmatpush1.bf16.msra.mxu0 0
    %845 = vmatprep.subr.bf16.mxu0 0
    %846 = vmatpush1.bf16.msra.mxu0 0
    %847 = vmatprep.subr.bf16.mxu0 0
    %848 = vmatpush1.bf16.msra.mxu0 0
    %849 = vmatprep.subr.bf16.mxu0 0
    %850 = vmatpush1.bf16.msra.mxu0 0
    %851 = vmatprep.subr.bf16.mxu0 0
    %852 = vmatpush1.bf16.msra.mxu0 0
    %853 = vmatprep.subr.bf16.mxu0 0
    %854 = vmatpush1.bf16.msra.mxu0 0
    %855 = vmatprep.subr.bf16.mxu0 %v790
    %856 = vmatpush1.bf16.msra.mxu0 %v789
    %857 = vmatprep.subr.bf16.mxu0 %v786
    %858 = vmatpush1.bf16.msra.mxu0 %v785
    %859 = vmatprep.subr.bf16.mxu0 0
    %860 = vmatpush2.bf16.msra.mxu0 0
    %861 = vmatprep.subr.bf16.mxu0 0
    %862 = vmatpush2.bf16.msra.mxu0 0
    %863 = vmatprep.subr.bf16.mxu0 0
    %864 = vmatpush2.bf16.msra.mxu0 0
    %865 = vmatprep.subr.bf16.mxu0 0
    %866 = vmatpush2.bf16.msra.mxu0 0
    %867 = vmatprep.subr.bf16.mxu0 0
    %868 = vmatpush2.bf16.msra.mxu0 0
    %869 = vmatprep.subr.bf16.mxu0 0
    %870 = vmatpush2.bf16.msra.mxu0 0
    %871 = vmatprep.subr.bf16.mxu0 0
    %872 = vmatpush2.bf16.msra.mxu0 0
    %873 = vmatprep.subr.bf16.mxu0 0
    %874 = vmatpush2.bf16.msra.mxu0 0
    %875 = vmatprep.mubr.bf16.mxu0 0
    %876 = vmatmul.mubr.bf16.gmra.mxu0 %v800
    %v877 = vpop.f32.mrf.mxu0
    %v878 = vadd.f32 %v753, %v877
    %v879 = vpop.f32.mrf.mxu0
    %v880 = vadd.f32 %v755, %v879
    %v881 = vpop.f32.mrf.mxu0
    %v882 = vpop.f32.mrf.mxu0
    %883 = vdwg.mxu0
    %v884 = vld [vmem:[%s7] sm:$0xf]
    %v886 = vlaneseq
    %v887 = vshrl.u32 %v886, 7
    %v888 = vsub.s32 0, %v887
    %v889 = vrot.slane %v884, %v888
    %v890 = vlaneseq
    %v891 = vshrl.u32 %v890, 7
    %v892 = vsub.s32 1, %v891
    %v893 = vrot.slane %v884, %v892
    %v894 = vlaneseq
    %v895 = vshrl.u32 %v894, 7
    %v896 = vsub.s32 2, %v895
    %v897 = vrot.slane %v884, %v896
    %v898 = vlaneseq
    %v899 = vshrl.u32 %v898, 7
    %v900 = vsub.s32 3, %v899
    %v901 = vrot.slane %v884, %v900
    %v906 = vadd.f32 %v837, %v889
    %v907 = vadd.f32 %v839, %v893
    %v908 = vadd.f32 %v878, %v897
    %v909 = vadd.f32 %v880, %v901
    %v910 = vmax.f32 %v906, 0.0
    %v911 = vmax.f32 %v907, 0.0
    %v912 = vmax.f32 %v908, 0.0
    %v913 = vmax.f32 %v909, 0.0
    %v914 = vpack.c.bf16 %v910, %v910
    %v915 = vpack.c.bf16 %v911, %v911
    %v916 = vpack.c.bf16 %v912, %v912
    %v917 = vpack.c.bf16 %v913, %v913
    %v918 = vld [vmem:[#allocation13] sm:$0xf]
    %v919 = vld [vmem:[#allocation13 + $0x4] sm:$0xf]
    %v920 = vld [vmem:[#allocation13 + $0x8] sm:$0xf]
    %v921 = vld [vmem:[#allocation13 + $0xc] sm:$0xf]
    %v922 = vld [vmem:[#allocation13 + $0x10] sm:$0xf]
    %v923 = vld [vmem:[#allocation13 + $0x14] sm:$0xf]
    %v924 = vld [vmem:[#allocation13 + $0x18] sm:$0xf]
    %v925 = vld [vmem:[#allocation13 + $0x1c] sm:$0xf]
    %v926 = vld [vmem:[#allocation13 + $0x20] sm:$0xf]
    %v927 = vld [vmem:[#allocation13 + $0x24] sm:$0xf]
    %v928 = vld [vmem:[#allocation13 + $0x28] sm:$0xf]
    %v929 = vld [vmem:[#allocation13 + $0x2c] sm:$0xf]
    %v930 = vld [vmem:[#allocation13 + $0x30] sm:$0xf]
    %v931 = vld [vmem:[#allocation13 + $0x34] sm:$0xf]
    %v932 = vld [vmem:[#allocation13 + $0x38] sm:$0xf]
    %v933 = vld [vmem:[#allocation13 + $0x3c] sm:$0xf]
    %v934 = vld [vmem:[#allocation13 + $0x40] sm:$0xf]
    %v935 = vld [vmem:[#allocation13 + $0x44] sm:$0xf]
    %v936 = vld [vmem:[#allocation13 + $0x48] sm:$0xf]
    %v937 = vld [vmem:[#allocation13 + $0x4c] sm:$0xf]
    %v938 = vld [vmem:[#allocation13 + $0x50] sm:$0xf]
    %v939 = vld [vmem:[#allocation13 + $0x54] sm:$0xf]
    %v940 = vld [vmem:[#allocation13 + $0x58] sm:$0xf]
    %v941 = vld [vmem:[#allocation13 + $0x5c] sm:$0xf]
    %v942 = vld [vmem:[#allocation13 + $0x60] sm:$0xf]
    %v943 = vld [vmem:[#allocation13 + $0x64] sm:$0xf]
    %v944 = vld [vmem:[#allocation13 + $0x68] sm:$0xf]
    %v945 = vld [vmem:[#allocation13 + $0x6c] sm:$0xf]
    %v946 = vld [vmem:[#allocation13 + $0x70] sm:$0xf]
    %v947 = vld [vmem:[#allocation13 + $0x74] sm:$0xf]
    %v948 = vld [vmem:[#allocation13 + $0x78] sm:$0xf]
    %v949 = vld [vmem:[#allocation13 + $0x7c] sm:$0xf]
    %v950 = vld [vmem:[#allocation13 + $0x80] sm:$0xf]
    %v951 = vld [vmem:[#allocation13 + $0x84] sm:$0xf]
    %v952 = vld [vmem:[#allocation13 + $0x88] sm:$0xf]
    %v953 = vld [vmem:[#allocation13 + $0x8c] sm:$0xf]
    %v954 = vld [vmem:[#allocation13 + $0x90] sm:$0xf]
    %v955 = vld [vmem:[#allocation13 + $0x94] sm:$0xf]
    %v956 = vld [vmem:[#allocation13 + $0x98] sm:$0xf]
    %v957 = vld [vmem:[#allocation13 + $0x9c] sm:$0xf]
    %v958 = vld [vmem:[#allocation13 + $0xa0] sm:$0xf]
    %v959 = vld [vmem:[#allocation13 + $0xa4] sm:$0xf]
    %v960 = vld [vmem:[#allocation13 + $0xa8] sm:$0xf]
    %v961 = vld [vmem:[#allocation13 + $0xac] sm:$0xf]
    %v962 = vld [vmem:[#allocation13 + $0xb0] sm:$0xf]
    %v963 = vld [vmem:[#allocation13 + $0xb4] sm:$0xf]
    %v964 = vld [vmem:[#allocation13 + $0xb8] sm:$0xf]
    %v965 = vld [vmem:[#allocation13 + $0xbc] sm:$0xf]
    %v966 = vld [vmem:[#allocation13 + $0xc0] sm:$0xf]
    %v967 = vld [vmem:[#allocation13 + $0xc4] sm:$0xf]
    %v968 = vld [vmem:[#allocation13 + $0xc8] sm:$0xf]
    %v969 = vld [vmem:[#allocation13 + $0xcc] sm:$0xf]
    %v970 = vld [vmem:[#allocation13 + $0xd0] sm:$0xf]
    %v971 = vld [vmem:[#allocation13 + $0xd4] sm:$0xf]
    %v972 = vld [vmem:[#allocation13 + $0xd8] sm:$0xf]
    %v973 = vld [vmem:[#allocation13 + $0xdc] sm:$0xf]
    %v974 = vld [vmem:[#allocation13 + $0xe0] sm:$0xf]
    %v975 = vld [vmem:[#allocation13 + $0xe4] sm:$0xf]
    %v976 = vld [vmem:[#allocation13 + $0xe8] sm:$0xf]
    %v977 = vld [vmem:[#allocation13 + $0xec] sm:$0xf]
    %v978 = vld [vmem:[#allocation13 + $0xf0] sm:$0xf]
    %v979 = vld [vmem:[#allocation13 + $0xf4] sm:$0xf]
    %v980 = vld [vmem:[#allocation13 + $0xf8] sm:$0xf]
    %v981 = vld [vmem:[#allocation13 + $0xfc] sm:$0xf]
    %v982 = vld [vmem:[%s9] sm:$0x1]
    %v984 = vlaneseq
    %v985 = vshrl.u32 %v984, 7
    %v986 = vsub.s32 0, %v985
    %v987 = vrot.slane %v982, %v986
    %v1053 = vunpack.c.l.b16 %v918
    %v1054 = vunpack.c.l.b16 %v919
    %v1055 = vunpack.c.l.b16 %v920
    %v1056 = vunpack.c.l.b16 %v921
    %v1057 = vunpack.c.l.b16 %v922
    %v1058 = vunpack.c.l.b16 %v923
    %v1059 = vunpack.c.l.b16 %v924
    %v1060 = vunpack.c.l.b16 %v925
    %v1061 = vunpack.c.l.b16 %v926
    %v1062 = vunpack.c.l.b16 %v927
    %v1063 = vunpack.c.l.b16 %v928
    %v1064 = vunpack.c.l.b16 %v929
    %v1065 = vunpack.c.l.b16 %v930
    %v1066 = vunpack.c.l.b16 %v931
    %v1067 = vunpack.c.l.b16 %v932
    %v1068 = vunpack.c.l.b16 %v933
    %v1069 = vunpack.c.l.b16 %v934
    %v1070 = vunpack.c.l.b16 %v935
    %v1071 = vunpack.c.l.b16 %v936
    %v1072 = vunpack.c.l.b16 %v937
    %v1073 = vunpack.c.l.b16 %v938
    %v1074 = vunpack.c.l.b16 %v939
    %v1075 = vunpack.c.l.b16 %v940
    %v1076 = vunpack.c.l.b16 %v941
    %v1077 = vunpack.c.l.b16 %v942
    %v1078 = vunpack.c.l.b16 %v943
    %v1079 = vunpack.c.l.b16 %v944
    %v1080 = vunpack.c.l.b16 %v945
    %v1081 = vunpack.c.l.b16 %v946
    %v1082 = vunpack.c.l.b16 %v947
    %v1083 = vunpack.c.l.b16 %v948
    %v1084 = vunpack.c.l.b16 %v949
    %v1085 = vunpack.c.l.b16 %v950
    %v1086 = vunpack.c.l.b16 %v951
    %v1087 = vunpack.c.l.b16 %v952
    %v1088 = vunpack.c.l.b16 %v953
    %v1089 = vunpack.c.l.b16 %v954
    %v1090 = vunpack.c.l.b16 %v955
    %v1091 = vunpack.c.l.b16 %v956
    %v1092 = vunpack.c.l.b16 %v957
    %v1093 = vunpack.c.l.b16 %v958
    %v1094 = vunpack.c.l.b16 %v959
    %v1095 = vunpack.c.l.b16 %v960
    %v1096 = vunpack.c.l.b16 %v961
    %v1097 = vunpack.c.l.b16 %v962
    %v1098 = vunpack.c.l.b16 %v963
    %v1099 = vunpack.c.l.b16 %v964
    %v1100 = vunpack.c.l.b16 %v965
    %v1101 = vunpack.c.l.b16 %v966
    %v1102 = vunpack.c.l.b16 %v967
    %v1103 = vunpack.c.l.b16 %v968
    %v1104 = vunpack.c.l.b16 %v969
    %v1105 = vunpack.c.l.b16 %v970
    %v1106 = vunpack.c.l.b16 %v971
    %v1107 = vunpack.c.l.b16 %v972
    %v1108 = vunpack.c.l.b16 %v973
    %v1109 = vunpack.c.l.b16 %v974
    %v1110 = vunpack.c.l.b16 %v975
    %v1111 = vunpack.c.l.b16 %v976
    %v1112 = vunpack.c.l.b16 %v977
    %v1113 = vunpack.c.l.b16 %v978
    %v1114 = vunpack.c.l.b16 %v979
    %v1115 = vunpack.c.l.b16 %v980
    %v1116 = vunpack.c.l.b16 %v981
    %v1117 = vpack.c.b16 %v1054, %v1053
    %v1118 = vpack.c.b16 %v1056, %v1055
    %v1119 = vpack.c.b16 %v1058, %v1057
    %v1120 = vpack.c.b16 %v1060, %v1059
    %v1121 = vpack.c.b16 %v1062, %v1061
    %v1122 = vpack.c.b16 %v1064, %v1063
    %v1123 = vpack.c.b16 %v1066, %v1065
    %v1124 = vpack.c.b16 %v1068, %v1067
    %v1125 = vpack.c.b16 %v1070, %v1069
    %v1126 = vpack.c.b16 %v1072, %v1071
    %v1127 = vpack.c.b16 %v1074, %v1073
    %v1128 = vpack.c.b16 %v1076, %v1075
    %v1129 = vpack.c.b16 %v1078, %v1077
    %v1130 = vpack.c.b16 %v1080, %v1079
    %v1131 = vpack.c.b16 %v1082, %v1081
    %v1132 = vpack.c.b16 %v1084, %v1083
    %v1133 = vpack.c.b16 %v1086, %v1085
    %v1134 = vpack.c.b16 %v1088, %v1087
    %v1135 = vpack.c.b16 %v1090, %v1089
    %v1136 = vpack.c.b16 %v1092, %v1091
    %v1137 = vpack.c.b16 %v1094, %v1093
    %v1138 = vpack.c.b16 %v1096, %v1095
    %v1139 = vpack.c.b16 %v1098, %v1097
    %v1140 = vpack.c.b16 %v1100, %v1099
    %v1141 = vpack.c.b16 %v1102, %v1101
    %v1142 = vpack.c.b16 %v1104, %v1103
    %v1143 = vpack.c.b16 %v1106, %v1105
    %v1144 = vpack.c.b16 %v1108, %v1107
    %v1145 = vpack.c.b16 %v1110, %v1109
    %v1146 = vpack.c.b16 %v1112, %v1111
    %v1147 = vpack.c.b16 %v1114, %v1113
    %v1148 = vpack.c.b16 %v1116, %v1115
    %1181 = vmatprep.subr.bf16.mxu0 0
    %1182 = vmatpush1.bf16.msra.mxu0 %v1124
    %1183 = vmatprep.subr.bf16.mxu0 0
    %1184 = vmatpush1.bf16.msra.mxu0 %v1123
    %1185 = vmatprep.subr.bf16.mxu0 0
    %1186 = vmatpush1.bf16.msra.mxu0 %v1122
    %1187 = vmatprep.subr.bf16.mxu0 0
    %1188 = vmatpush1.bf16.msra.mxu0 %v1121
    %1189 = vmatprep.subr.bf16.mxu0 0
    %1190 = vmatpush1.bf16.msra.mxu0 %v1120
    %1191 = vmatprep.subr.bf16.mxu0 0
    %1192 = vmatpush1.bf16.msra.mxu0 %v1119
    %1193 = vmatprep.subr.bf16.mxu0 0
    %1194 = vmatpush1.bf16.msra.mxu0 %v1118
    %1195 = vmatprep.subr.bf16.mxu0 0
    %1196 = vmatpush1.bf16.msra.mxu0 %v1117
    %1197 = vmatprep.subr.bf16.mxu0 0
    %1198 = vmatpush2.bf16.msra.mxu0 %v1132
    %1199 = vmatprep.subr.bf16.mxu0 0
    %1200 = vmatpush2.bf16.msra.mxu0 %v1131
    %1201 = vmatprep.subr.bf16.mxu0 0
    %1202 = vmatpush2.bf16.msra.mxu0 %v1130
    %1203 = vmatprep.subr.bf16.mxu0 0
    %1204 = vmatpush2.bf16.msra.mxu0 %v1129
    %1205 = vmatprep.subr.bf16.mxu0 0
    %1206 = vmatpush2.bf16.msra.mxu0 %v1128
    %1207 = vmatprep.subr.bf16.mxu0 0
    %1208 = vmatpush2.bf16.msra.mxu0 %v1127
    %1209 = vmatprep.subr.bf16.mxu0 0
    %1210 = vmatpush2.bf16.msra.mxu0 %v1126
    %1211 = vmatprep.subr.bf16.mxu0 0
    %1212 = vmatpush2.bf16.msra.mxu0 %v1125
    %1213 = vmatprep.mubr.bf16.mxu0 %v915
    %1214 = vmatmul.mubr.bf16.gmra.mxu0 %v914
    %v1215 = vpop.f32.mrf.mxu0
    %v1216 = vadd.f32 %v987, %v1215
    %v1217 = vpop.f32.mrf.mxu0
    %v1218 = vpop.f32.mrf.mxu0
    %v1219 = vpop.f32.mrf.mxu0
    %1220 = vdwg.mxu0
    %1221 = vmatprep.subr.bf16.mxu0 0
    %1222 = vmatpush1.bf16.msra.mxu0 %v1140
    %1223 = vmatprep.subr.bf16.mxu0 0
    %1224 = vmatpush1.bf16.msra.mxu0 %v1139
    %1225 = vmatprep.subr.bf16.mxu0 0
    %1226 = vmatpush1.bf16.msra.mxu0 %v1138
    %1227 = vmatprep.subr.bf16.mxu0 0
    %1228 = vmatpush1.bf16.msra.mxu0 %v1137
    %1229 = vmatprep.subr.bf16.mxu0 0
    %1230 = vmatpush1.bf16.msra.mxu0 %v1136
    %1231 = vmatprep.subr.bf16.mxu0 0
    %1232 = vmatpush1.bf16.msra.mxu0 %v1135
    %1233 = vmatprep.subr.bf16.mxu0 0
    %1234 = vmatpush1.bf16.msra.mxu0 %v1134
    %1235 = vmatprep.subr.bf16.mxu0 0
    %1236 = vmatpush1.bf16.msra.mxu0 %v1133
    %1237 = vmatprep.subr.bf16.mxu0 0
    %1238 = vmatpush2.bf16.msra.mxu0 %v1148
    %1239 = vmatprep.subr.bf16.mxu0 0
    %1240 = vmatpush2.bf16.msra.mxu0 %v1147
    %1241 = vmatprep.subr.bf16.mxu0 0
    %1242 = vmatpush2.bf16.msra.mxu0 %v1146
    %1243 = vmatprep.subr.bf16.mxu0 0
    %1244 = vmatpush2.bf16.msra.mxu0 %v1145
    %1245 = vmatprep.subr.bf16.mxu0 0
    %1246 = vmatpush2.bf16.msra.mxu0 %v1144
    %1247 = vmatprep.subr.bf16.mxu0 0
    %1248 = vmatpush2.bf16.msra.mxu0 %v1143
    %1249 = vmatprep.subr.bf16.mxu0 0
    %1250 = vmatpush2.bf16.msra.mxu0 %v1142
    %1251 = vmatprep.subr.bf16.mxu0 0
    %1252 = vmatpush2.bf16.msra.mxu0 %v1141
    %1253 = vmatprep.mubr.bf16.mxu0 %v917
    %1254 = vmatmul.mubr.bf16.gmra.mxu0 %v916
    %v1255 = vpop.f32.mrf.mxu0
    %v1256 = vadd.f32 %v1216, %v1255
    %v1257 = vpop.f32.mrf.mxu0
    %v1258 = vpop.f32.mrf.mxu0
    %v1259 = vpop.f32.mrf.mxu0
    %1260 = vdwg.mxu0
    %v1261 = vmul.f32 %v130, %v130
    %v1262 = vsel %vm143, %v1261, 0.0
    %1263 = vadd.xlane.f32.xlu0 %v1262
    %v1264 = vpop.xlane.xlu0 %1263
    %v1265 = vadd.f32 %v1264, 1e-08
    %v1266 = vrsqrt.pop %v1265
    %v1267 = vmul.f32 %v130, %v1266
    %v1268 = vmul.f32 %v615, %v615
    %v1269 = vsel %vm143, %v1268, 0.0
    %1270 = vadd.xlane.f32.xlu0 %v1269
    %v1271 = vpop.xlane.xlu0 %1270
    %v1272 = vadd.f32 %v1271, 1e-08
    %v1273 = vrsqrt.pop %v1272
    %v1274 = vmul.f32 %v615, %v1273
    %v1275 = vpack.c.bf16 %v1267, %v1267
    %v1276 = vpack.c.bf16 %v1274, %v1274
    %v1278 = vsel %vm168, %v1275, 0
    %v1281 = vsel %vm168, %v1276, 0
    %1283 = vmatprep.subr.bf16.mxu0 0
    %1284 = vmatpush1.bf16.xpose.msra.mxu0 0
    %1285 = vmatprep.subr.bf16.mxu0 0
    %1286 = vmatpush1.bf16.xpose.msra.mxu0 0
    %1287 = vmatprep.subr.bf16.mxu0 0
    %1288 = vmatpush1.bf16.xpose.msra.mxu0 0
    %1289 = vmatprep.subr.bf16.mxu0 0
    %1290 = vmatpush1.bf16.xpose.msra.mxu0 0
    %1291 = vmatprep.subr.bf16.mxu0 0
    %1292 = vmatpush1.bf16.xpose.msra.mxu0 0
    %1293 = vmatprep.subr.bf16.mxu0 0
    %1294 = vmatpush1.bf16.xpose.msra.mxu0 0
    %1295 = vmatprep.subr.bf16.mxu0 0
    %1296 = vmatpush1.bf16.xpose.msra.mxu0 0
    %1297 = vmatprep.subr.bf16.mxu0 0
    %1298 = vmatpush1.bf16.xpose.msra.mxu0 %v1281
    %1299 = vmatprep.subr.bf16.mxu0 0
    %1300 = vmatpush2.bf16.xpose.msra.mxu0 0
    %1301 = vmatprep.subr.bf16.mxu0 0
    %1302 = vmatpush2.bf16.xpose.msra.mxu0 0
    %1303 = vmatprep.subr.bf16.mxu0 0
    %1304 = vmatpush2.bf16.xpose.msra.mxu0 0
    %1305 = vmatprep.subr.bf16.mxu0 0
    %1306 = vmatpush2.bf16.xpose.msra.mxu0 0
    %1307 = vmatprep.subr.bf16.mxu0 0
    %1308 = vmatpush2.bf16.xpose.msra.mxu0 0
    %1309 = vmatprep.subr.bf16.mxu0 0
    %1310 = vmatpush2.bf16.xpose.msra.mxu0 0
    %1311 = vmatprep.subr.bf16.mxu0 0
    %1312 = vmatpush2.bf16.xpose.msra.mxu0 0
    %1313 = vmatprep.subr.bf16.mxu0 0
    %1314 = vmatpush2.bf16.xpose.msra.mxu0 0
    %1315 = vmatprep.mubr.bf16.mxu0 0
    %1316 = vmatmul.mubr.bf16.gmra.mxu0 %v1278
    %v1317 = vpop.f32.mrf.mxu0
    %v1318 = vadd.f32 0.0, %v1317
    %v1319 = vpop.f32.mrf.mxu0
    %v1320 = vpop.f32.mrf.mxu0
    %v1321 = vpop.f32.mrf.mxu0
    %1322 = vdwg.mxu0
    %v1323 = vld [vmem:[%s2] sm:$0x3]
    %vm1324 = vcmask 1041408
    %v1325 = vsel %vm1324, %v1256, -inf
    %1326 = vmax.xlane.f32.xlu0 %v1325
    %v1327 = vpop.xlane.xlu0 %1326
    %v1328 = vsub.f32 %v1256, %v1327
    %v1329 = vmul.f32 %v1328, 1.442695
    %v1330 = vpow.pop %v1329
    %v1331 = vsel %vm1324, %v1330, 0.0
    %1332 = vadd.xlane.f32.xlu0 %v1331
    %v1333 = vpop.xlane.xlu0 %1332
    %v1334 = vlog2.pop %v1333
    %v1335 = vmul.f32 %v1334, 0.6931472
    %v1336 = vadd.f32 %v1335, %v1327
    %v1337 = vmul.f32 %v1323, %v1256
    %v1338 = vsel %vm1324, %v1337, 0.0
    %1339 = vadd.xlane.f32.xlu0 %v1338
    %v1340 = vpop.xlane.xlu0 %1339
    %v1341 = vsub.f32 %v1336, %v1340
    %v1342 = vmax.f32 %v1256, 0.0
    %v1343 = vadd.f32 %v1342, 1.0
    %v1344 = vsel %vm1324, %v1343, 0.0
    %1345 = vadd.xlane.f32.xlu0 %v1344
    %v1346 = vpop.xlane.xlu0 %1345
    %v1347 = vsub.f32 %v1346, 120.0
    %v1348 = vlog2.pop %v1347
    %v1349 = vmul.f32 %v1348, 0.6931472
    %v1350 = vlog2.pop %v1343
    %v1351 = vmul.f32 %v1350, 0.6931472
    %v1352 = vsub.f32 %v1349, %v1351
    %v1353 = vmul.f32 %v1323, %v1352
    %v1354 = vsel %vm1324, %v1353, 0.0
    %1355 = vadd.xlane.f32.xlu0 %v1354
    %v1356 = vpop.xlane.xlu0 %1355
    %vm1357 = vcmask 7168
    %v1358 = vsel %vm1357, %v1341, %v1356
    %vm1359 = vcmask 9216
    %v1360 = vsel %vm1359, %v1358, 0.0
    %v1361 = vrot.slane %v1360, 4
    %v1362 = vadd.f32 %v1360, %v1361
    %v1363 = vrot.slane %v1362, 2
    %v1364 = vadd.f32 %v1362, %v1363
    %v1365 = vrot.slane %v1364, 1
    %v1366 = vadd.f32 %v1364, %v1365
    %v1367 = vmul.f32 %v1366, 0.5
    %vm1368 = vcmask 15360
    %v1369 = vsel %vm1368, %v1318, 0.0
    %v1370 = vsel %vm1368, %v1367, 0.0
    %v1372 = vrot.slane %v1256, 6
    %v1375 = vrot.slane %v1370, 4
    %v1377 = vsel %vm1324, %v1369, %v1372
    %vm1378 = vcmask 1043456
    %v1379 = vsel %vm1378, %v1377, %v1375
    %1380 = vst [vmem:[#allocation14] sm:$0x1f] %v1379
    // Predicated region
    $region70: #{tpu_custom_call.1} parent=1 // pred_check
      _
    $region71: #{tpu_custom_call.1} parent=1 // pred_check_branch
      %1382 = sbr.rel (0) target = $region73
    $region72: #{tpu_custom_call.1} parent=1 // pred_region
      %s1384 = ssub.s32 128, 128
      %1385 = vsyncadd [#allocation4], %s1384
      %s1387 = sshll.u32 [#allocation14], 4
      %s1388 = int_to_ptr.vmem [resolvable:$true] %s1387
      %1390 = dma.vmem_to_hbm [thread:$0]  %s1388, 128, %s10, [#allocation4]
    $region73: #{tpu_custom_call.1} parent=1 // pred_fallthru
      _
    // Predicated region
    $region74: #{tpu_custom_call.1} parent=1 // pred_check
      _
    $region75: #{tpu_custom_call.1} parent=1 // pred_check_branch
      %1392 = sbr.rel (0) target = $region77
    $region76: #{tpu_custom_call.1} parent=1 // pred_region
      %1393 = dma.done [#allocation4], 128
    $region77: #{tpu_custom_call.1} parent=1 // pred_fallthru
      _
    %1394 = vsyncpa [#allocation3], 1
    %1395 = vsyncpa [#allocation6], 1
    %1396 = vsyncpa [#allocation9], 1
    %1397 = vsyncpa [#allocation12], 1
    %1398 = vsyncpa [#allocation4], 1

</llo_original>
